<compile_context>
chip_gen: v5e
topology: v5e:2x2
jax: 0.10.0
libtpu: 0.0.40
codegen_flags: <defaults>
</compile_context>

<pallas_src>
import functools

import jax
import jax.numpy as jnp
from jax.experimental import pallas as pl
from jax.experimental.pallas import tpu as pltpu


def _cross_attn_kernel(x_ref, k_ref, v_ref,
                       wq_ref, wk_ref, wv_ref, wp_ref, bp_ref,
                       o_ref, *, num_heads, head_dim):
    tb, n_q, c = x_ref.shape
    n_kv = k_ref.shape[1]
    h, d = num_heads, head_dim

    # Fuse the TB batch elements into the row dim (leading-dim reshape, no lane
    # movement) and cast once; inputs arrive already bf16 from the wrapper.
    x2 = x_ref[...].reshape(tb * n_q, c)          # (TB*N,  C) bf16
    k2 = k_ref[...].reshape(tb * n_kv, c)         # (TB*Nk, C) bf16
    v2 = v_ref[...].reshape(tb * n_kv, c)         # (TB*Nk, C) bf16

    # Broadcast the rows across heads once (major-dim replication, cheap VPU
    # copies) so the projections below are ONE H-batched MXU call each instead
    # of H narrow calls or H 8-lane slices of a fused projection.
    xh = jnp.broadcast_to(x2[None], (h, tb * n_q, c))
    kh = jnp.broadcast_to(k2[None], (h, tb * n_kv, c))
    vh = jnp.broadcast_to(v2[None], (h, tb * n_kv, c))

    # Head-batched q/k/v projections: weights are (H, C, D) bf16, f32 accum.
    # (`scale` is already folded into Wq in the wrapper; qkv_bias=False.)
    q = jnp.einsum('hrc,hcd->hrd', xh, wq_ref[...],
                   preferred_element_type=jnp.float32)          # (H, TB*N,  D)
    kk = jnp.einsum('hrc,hcd->hrd', kh, wk_ref[...],
                    preferred_element_type=jnp.float32)         # (H, TB*Nk, D)
    vv = jnp.einsum('hrc,hcd->hrd', vh, wv_ref[...],
                    preferred_element_type=jnp.float32)         # (H, TB*Nk, D)

    # (H, TB*N, D) -> (H*TB, N, D): splits the sublane dim on 8-row boundaries
    # (layout-preserving); cast to bf16 once per tensor after the reshape.
    qb = q.reshape(h * tb, n_q, d).astype(jnp.bfloat16)
    kb = kk.reshape(h * tb, n_kv, d).astype(jnp.bfloat16)
    vb = vv.reshape(h * tb, n_kv, d).astype(jnp.bfloat16)

    # Attention, batched over (H*TB) in a single dot_general per step; the K
    # contraction uses the last dims directly (no kh.T through the XLU).
    s = jnp.einsum('bqd,bkd->bqk', qb, kb,
                   preferred_element_type=jnp.float32)          # (H*TB, N, Nk) f32
    s = s - jnp.max(s, axis=-1, keepdims=True)
    p = jnp.exp(s)                                              # f32 softmax math
    denom = jnp.sum(p, axis=-1, keepdims=True)                  # (H*TB, N, 1)

    # TODO(synk): attn_drop / proj_drop are identity at p=0.0 (eval); dropout not implemented.
    o = jnp.einsum('bqk,bkd->bqd', p.astype(jnp.bfloat16), vb,
                   preferred_element_type=jnp.float32)          # (H*TB, N, D)
    # Deferred softmax normalization on the small (N, D) output (EUP reciprocal).
    o = o * pl.reciprocal(denom, approx=True)

    # Final projection (nn.Linear(all_head_dim, dim)): one H-batched matmul
    # against per-head Wp (H, D, C), then a major-dim head-sum (VPU adds) —
    # no f32 scratch slab, no concat, no masked partial-lane slab writes.
    o3 = o.reshape(h, tb * n_q, d).astype(jnp.bfloat16)         # (H, TB*N, D)
    y_h = jnp.einsum('hrd,hdc->hrc', o3, wp_ref[...],
                     preferred_element_type=jnp.float32)        # (H, TB*N, C)
    y = jnp.sum(y_h, axis=0) + bp_ref[...]                      # (TB*N, C) + (1, C)

    o_ref[...] = y.reshape(tb, n_q, c).astype(o_ref.dtype)


def cross_attention(x, k, v, wq, wk, wv, wp, bp, *, num_heads, block_b=None):
    B, N, C = x.shape
    Nk = k.shape[1]
    Nv = v.shape[1]
    assert Nk == Nv, "attn @ v requires N_k == N_v"
    all_head_dim = wq.shape[1]
    assert all_head_dim % num_heads == 0
    head_dim = all_head_dim // num_heads
    scale = head_dim ** (-0.5)

    if block_b is None:
        # Overhead-bound at small shapes (~0.35us/step, working set a few KB):
        # default to a single grid step (v5e/v6e have one TensorCore anyway).
        # Split the batch into two "parallel" steps only when each half carries
        # enough rows for a second TensorCore (v7x) to pay for its own per-step
        # overhead and an extra round of input DMAs.
        per_step_elems = B * (N + 2 * Nk) * C
        if (B % 2 == 0) and per_step_elems >= (1 << 20):
            block_b = B // 2
        else:
            block_b = B
    assert B % block_b == 0, "block_b must divide B"
    TB = block_b

    # One-time wrapper-side prep: fold `scale` into Wq, split the weights per
    # head -> (H, C, D) / (H, D, C) so the kernel never slices head chunks out
    # of the lane dim, and cast matmul operands to bf16 (f32 accumulation inside
    # the kernel; softmax stays f32 everywhere, required on v5e).
    xb = x.astype(jnp.bfloat16)
    kb = k.astype(jnp.bfloat16)
    vb = v.astype(jnp.bfloat16)
    wq_h = (wq * scale).reshape(C, num_heads, head_dim).transpose(1, 0, 2).astype(jnp.bfloat16)
    wk_h = wk.reshape(C, num_heads, head_dim).transpose(1, 0, 2).astype(jnp.bfloat16)
    wv_h = wv.reshape(C, num_heads, head_dim).transpose(1, 0, 2).astype(jnp.bfloat16)
    wp_h = wp.reshape(num_heads, head_dim, C).astype(jnp.bfloat16)
    bpf = bp.astype(jnp.float32).reshape(1, C)

    kernel = functools.partial(
        _cross_attn_kernel, num_heads=num_heads, head_dim=head_dim
    )

    return pl.pallas_call(
        kernel,
        out_shape=jax.ShapeDtypeStruct((B, N, C), x.dtype),
        grid_spec=pltpu.PrefetchScalarGridSpec(
            num_scalar_prefetch=0,
            grid=(B // TB,),
            in_specs=[
                pl.BlockSpec((TB, N, C), lambda b: (b, 0, 0)),                  # x
                pl.BlockSpec((TB, Nk, C), lambda b: (b, 0, 0)),                 # k
                pl.BlockSpec((TB, Nv, C), lambda b: (b, 0, 0)),                 # v
                pl.BlockSpec((num_heads, C, head_dim), lambda b: (0, 0, 0)),    # Wq (pre-scaled, per-head)
                pl.BlockSpec((num_heads, C, head_dim), lambda b: (0, 0, 0)),    # Wk (per-head)
                pl.BlockSpec((num_heads, C, head_dim), lambda b: (0, 0, 0)),    # Wv (per-head)
                pl.BlockSpec((num_heads, head_dim, C), lambda b: (0, 0, 0)),    # Wproj (per-head)
                pl.BlockSpec((1, C), lambda b: (0, 0)),                         # bproj
            ],
            out_specs=pl.BlockSpec((TB, N, C), lambda b: (b, 0, 0)),
        ),
        compiler_params=pltpu.CompilerParams(
            dimension_semantics=("parallel",),
            vmem_limit_bytes=32 * 1024 * 1024,
        ),
    )(xb, kb, vb, wq_h, wk_h, wv_h, wp_h, bpf)


def _reference(x, k, v, wq, wk, wv, wp, bp, *, num_heads):
    """Pure-JAX (f32) reference mirroring the PyTorch forward."""
    B, N, C = x.shape
    all_head_dim = wq.shape[1]
    head_dim = all_head_dim // num_heads
    scale = head_dim ** (-0.5)

    q = (x @ wq).reshape(B, N, num_heads, head_dim).transpose(0, 2, 1, 3)
    kk = (k @ wk).reshape(B, k.shape[1], num_heads, head_dim).transpose(0, 2, 1, 3)
    vv = (v @ wv).reshape(B, v.shape[1], num_heads, head_dim).transpose(0, 2, 1, 3)
    q = q * scale
    attn = jnp.einsum("bhqd,bhkd->bhqk", q, kk)
    attn = jax.nn.softmax(attn, axis=-1)
    out = jnp.einsum("bhqk,bhkd->bhqd", attn, vv)
    out = out.transpose(0, 2, 1, 3).reshape(B, N, all_head_dim)
    return out @ wp + bp[0]


if __name__ == "__main__":
    # Small shapes consistent with the module's forward.
    B, N, Nk, Nv = 8, 8, 16, 16
    dim = 32
    num_heads = 4
    head_dim = dim // num_heads
    all_head_dim = head_dim * num_heads

    key = jax.random.PRNGKey(0)
    ks = jax.random.split(key, 8)
    x = jax.random.normal(ks[0], (B, N, dim), jnp.float32)
    k_in = jax.random.normal(ks[1], (B, Nk, dim), jnp.float32)
    v_in = jax.random.normal(ks[2], (B, Nv, dim), jnp.float32)

    # Deterministic parameter init (nn.Linear weights stored transposed: (in, out)).
    wq = jax.random.normal(ks[3], (dim, all_head_dim), jnp.float32) * 0.05
    wk = jax.random.normal(ks[4], (dim, all_head_dim), jnp.float32) * 0.05
    wv = jax.random.normal(ks[5], (dim, all_head_dim), jnp.float32) * 0.05
    wp = jax.random.normal(ks[6], (all_head_dim, dim), jnp.float32) * 0.05
    bp = jax.random.normal(ks[7], (1, dim), jnp.float32) * 0.05

    out = cross_attention(x, k_in, v_in, wq, wk, wv, wp, bp, num_heads=num_heads)
    out = jax.block_until_ready(out)

    ref = _reference(x, k_in, v_in, wq, wk, wv, wp, bp, num_heads=num_heads)
    assert out.shape == (B, N, dim)
    # bf16 matmul operands + approximate softmax reciprocal inside the kernel
    # -> relaxed tolerance vs the f32 reference.
    assert jnp.allclose(out, ref, atol=3e-2, rtol=3e-2), "mismatch vs pure-JAX reference"

    print("KERNEL_OK")
</pallas_src>

<mosaic_0001>
module attributes {stable_mosaic.version = 11 : i64} {
  func.func @_cross_attn_kernel(%arg0: i32, %arg1: memref<8x8x32xbf16, #tpu.memory_space<vmem>>, %arg2: memref<8x16x32xbf16, #tpu.memory_space<vmem>>, %arg3: memref<8x16x32xbf16, #tpu.memory_space<vmem>>, %arg4: memref<4x32x8xbf16, #tpu.memory_space<vmem>>, %arg5: memref<4x32x8xbf16, #tpu.memory_space<vmem>>, %arg6: memref<4x32x8xbf16, #tpu.memory_space<vmem>>, %arg7: memref<4x8x32xbf16, #tpu.memory_space<vmem>>, %arg8: memref<1x32xf32, #tpu.memory_space<vmem>>, %arg9: memref<8x8x32xf32, #tpu.memory_space<vmem>>) attributes {dimension_semantics = [#tpu.dimension_semantics<parallel>], iteration_bounds = array<i64: 1>, scalar_prefetch = 0 : i64, scratch_operands = 0 : i64, tpu.core_type = #tpu.core_type<tc>, window_params = [{transform_indices = @transform_0, window_bounds = array<i64: 8, 8, 32>}, {transform_indices = @transform_1, window_bounds = array<i64: 8, 16, 32>}, {transform_indices = @transform_2, window_bounds = array<i64: 8, 16, 32>}, {pipeline_mode = #tpu.pipeline_mode<synchronous>, transform_indices = @transform_3, window_bounds = array<i64: 4, 32, 8>}, {pipeline_mode = #tpu.pipeline_mode<synchronous>, transform_indices = @transform_4, window_bounds = array<i64: 4, 32, 8>}, {pipeline_mode = #tpu.pipeline_mode<synchronous>, transform_indices = @transform_5, window_bounds = array<i64: 4, 32, 8>}, {pipeline_mode = #tpu.pipeline_mode<synchronous>, transform_indices = @transform_6, window_bounds = array<i64: 4, 8, 32>}, {pipeline_mode = #tpu.pipeline_mode<synchronous>, transform_indices = @transform_7, window_bounds = array<i64: 1, 32>}, {transform_indices = @transform_8, window_bounds = array<i64: 8, 8, 32>}]} {
    %c0 = arith.constant 0 : index
    %c0_0 = arith.constant 0 : index
    %c0_1 = arith.constant 0 : index
    %0 = vector.load %arg1[%c0, %c0_0, %c0_1] : memref<8x8x32xbf16, #tpu.memory_space<vmem>>, vector<8x8x32xbf16>
    %1 = vector.shape_cast %0 : vector<8x8x32xbf16> to vector<64x32xbf16>
    %c0_2 = arith.constant 0 : index
    %c0_3 = arith.constant 0 : index
    %c0_4 = arith.constant 0 : index
    %2 = vector.load %arg2[%c0_2, %c0_3, %c0_4] : memref<8x16x32xbf16, #tpu.memory_space<vmem>>, vector<8x16x32xbf16>
    %3 = vector.shape_cast %2 : vector<8x16x32xbf16> to vector<128x32xbf16>
    %c0_5 = arith.constant 0 : index
    %c0_6 = arith.constant 0 : index
    %c0_7 = arith.constant 0 : index
    %4 = vector.load %arg3[%c0_5, %c0_6, %c0_7] : memref<8x16x32xbf16, #tpu.memory_space<vmem>>, vector<8x16x32xbf16>
    %5 = vector.shape_cast %4 : vector<8x16x32xbf16> to vector<128x32xbf16>
    %6 = vector.shape_cast %1 : vector<64x32xbf16> to vector<1x64x32xbf16>
    %7 = vector.shape_cast %6 : vector<1x64x32xbf16> to vector<1x64x32xbf16>
    %8 = vector.broadcast %7 : vector<1x64x32xbf16> to vector<4x64x32xbf16>
    %9 = vector.shape_cast %3 : vector<128x32xbf16> to vector<1x128x32xbf16>
    %10 = vector.shape_cast %9 : vector<1x128x32xbf16> to vector<1x128x32xbf16>
    %11 = vector.broadcast %10 : vector<1x128x32xbf16> to vector<4x128x32xbf16>
    %12 = vector.shape_cast %5 : vector<128x32xbf16> to vector<1x128x32xbf16>
    %13 = vector.shape_cast %12 : vector<1x128x32xbf16> to vector<1x128x32xbf16>
    %14 = vector.broadcast %13 : vector<1x128x32xbf16> to vector<4x128x32xbf16>
    %c0_8 = arith.constant 0 : index
    %c0_9 = arith.constant 0 : index
    %c0_10 = arith.constant 0 : index
    %15 = vector.load %arg4[%c0_8, %c0_9, %c0_10] : memref<4x32x8xbf16, #tpu.memory_space<vmem>>, vector<4x32x8xbf16>
    "tpu.trace_start"() <{level = 10 : i32, message = "hrc,hcd->hrd"}> : () -> ()
    %cst = arith.constant dense<0.000000e+00> : vector<4x64x8xf32>
    %16 = tpu.matmul %8, %15, %cst {dimension_numbers = #tpu.dot_dimension_numbers<[2], [1], [1], [2], [0, 0, 0, 1, 1, 2], [0], [0]>} : vector<4x64x32xbf16>, vector<4x32x8xbf16>, vector<4x64x8xf32> -> vector<4x64x8xf32>
    "tpu.trace_stop"() : () -> ()
    %c0_11 = arith.constant 0 : index
    %c0_12 = arith.constant 0 : index
    %c0_13 = arith.constant 0 : index
    %17 = vector.load %arg5[%c0_11, %c0_12, %c0_13] : memref<4x32x8xbf16, #tpu.memory_space<vmem>>, vector<4x32x8xbf16>
    "tpu.trace_start"() <{level = 10 : i32, message = "hrc,hcd->hrd"}> : () -> ()
    %cst_14 = arith.constant dense<0.000000e+00> : vector<4x128x8xf32>
    %18 = tpu.matmul %11, %17, %cst_14 {dimension_numbers = #tpu.dot_dimension_numbers<[2], [1], [1], [2], [0, 0, 0, 1, 1, 2], [0], [0]>} : vector<4x128x32xbf16>, vector<4x32x8xbf16>, vector<4x128x8xf32> -> vector<4x128x8xf32>
    "tpu.trace_stop"() : () -> ()
    %c0_15 = arith.constant 0 : index
    %c0_16 = arith.constant 0 : index
    %c0_17 = arith.constant 0 : index
    %19 = vector.load %arg6[%c0_15, %c0_16, %c0_17] : memref<4x32x8xbf16, #tpu.memory_space<vmem>>, vector<4x32x8xbf16>
    "tpu.trace_start"() <{level = 10 : i32, message = "hrc,hcd->hrd"}> : () -> ()
    %cst_18 = arith.constant dense<0.000000e+00> : vector<4x128x8xf32>
    %20 = tpu.matmul %14, %19, %cst_18 {dimension_numbers = #tpu.dot_dimension_numbers<[2], [1], [1], [2], [0, 0, 0, 1, 1, 2], [0], [0]>} : vector<4x128x32xbf16>, vector<4x32x8xbf16>, vector<4x128x8xf32> -> vector<4x128x8xf32>
    "tpu.trace_stop"() : () -> ()
    %21 = vector.shape_cast %16 : vector<4x64x8xf32> to vector<32x8x8xf32>
    %22 = arith.truncf %21 : vector<32x8x8xf32> to vector<32x8x8xbf16>
    %23 = vector.shape_cast %18 : vector<4x128x8xf32> to vector<32x16x8xf32>
    %24 = arith.truncf %23 : vector<32x16x8xf32> to vector<32x16x8xbf16>
    %25 = vector.shape_cast %20 : vector<4x128x8xf32> to vector<32x16x8xf32>
    %26 = arith.truncf %25 : vector<32x16x8xf32> to vector<32x16x8xbf16>
    "tpu.trace_start"() <{level = 10 : i32, message = "bqd,bkd->bqk"}> : () -> ()
    %cst_19 = arith.constant dense<0.000000e+00> : vector<32x8x16xf32>
    %27 = tpu.matmul %22, %24, %cst_19 {dimension_numbers = #tpu.dot_dimension_numbers<[2], [2], [1], [1], [0, 0, 0, 1, 1, 1], [0], [0]>} : vector<32x8x8xbf16>, vector<32x16x8xbf16>, vector<32x8x16xf32> -> vector<32x8x16xf32>
    "tpu.trace_stop"() : () -> ()
    %cst_20 = arith.constant dense<0xFF800000> : vector<32x8xf32>
    %28 = vector.multi_reduction <maximumf>, %27, %cst_20 [2] : vector<32x8x16xf32> to vector<32x8xf32>
    %29 = vector.shape_cast %28 : vector<32x8xf32> to vector<32x8x1xf32>
    %30 = vector.broadcast %29 : vector<32x8x1xf32> to vector<32x8x16xf32>
    %31 = arith.subf %27, %30 : vector<32x8x16xf32>
    %32 = math.exp %31 : vector<32x8x16xf32>
    %cst_21 = arith.constant dense<0.000000e+00> : vector<32x8xf32>
    %33 = vector.multi_reduction <add>, %32, %cst_21 [2] : vector<32x8x16xf32> to vector<32x8xf32>
    %34 = vector.shape_cast %33 : vector<32x8xf32> to vector<32x8x1xf32>
    %35 = arith.truncf %32 : vector<32x8x16xf32> to vector<32x8x16xbf16>
    "tpu.trace_start"() <{level = 10 : i32, message = "bqk,bkd->bqd"}> : () -> ()
    %cst_22 = arith.constant dense<0.000000e+00> : vector<32x8x8xf32>
    %36 = tpu.matmul %35, %26, %cst_22 {dimension_numbers = #tpu.dot_dimension_numbers<[2], [1], [1], [2], [0, 0, 0, 1, 1, 2], [0], [0]>} : vector<32x8x16xbf16>, vector<32x16x8xbf16>, vector<32x8x8xf32> -> vector<32x8x8xf32>
    "tpu.trace_stop"() : () -> ()
    %37 = tpu.reciprocal %34 {approx = true} : vector<32x8x1xf32> -> vector<32x8x1xf32>
    %38 = vector.broadcast %37 : vector<32x8x1xf32> to vector<32x8x8xf32>
    %39 = arith.mulf %36, %38 : vector<32x8x8xf32>
    %40 = vector.shape_cast %39 : vector<32x8x8xf32> to vector<4x64x8xf32>
    %41 = arith.truncf %40 : vector<4x64x8xf32> to vector<4x64x8xbf16>
    %c0_23 = arith.constant 0 : index
    %c0_24 = arith.constant 0 : index
    %c0_25 = arith.constant 0 : index
    %42 = vector.load %arg7[%c0_23, %c0_24, %c0_25] : memref<4x8x32xbf16, #tpu.memory_space<vmem>>, vector<4x8x32xbf16>
    "tpu.trace_start"() <{level = 10 : i32, message = "hrd,hdc->hrc"}> : () -> ()
    %cst_26 = arith.constant dense<0.000000e+00> : vector<4x64x32xf32>
    %43 = tpu.matmul %41, %42, %cst_26 {dimension_numbers = #tpu.dot_dimension_numbers<[2], [1], [1], [2], [0, 0, 0, 1, 1, 2], [0], [0]>} : vector<4x64x8xbf16>, vector<4x8x32xbf16>, vector<4x64x32xf32> -> vector<4x64x32xf32>
    "tpu.trace_stop"() : () -> ()
    %cst_27 = arith.constant dense<0.000000e+00> : vector<64x32xf32>
    %44 = vector.multi_reduction <add>, %43, %cst_27 [0] : vector<4x64x32xf32> to vector<64x32xf32>
    %c0_28 = arith.constant 0 : index
    %c0_29 = arith.constant 0 : index
    %45 = vector.load %arg8[%c0_28, %c0_29] : memref<1x32xf32, #tpu.memory_space<vmem>>, vector<1x32xf32>
    %46 = vector.broadcast %45 : vector<1x32xf32> to vector<64x32xf32>
    %47 = arith.addf %44, %46 : vector<64x32xf32>
    %48 = vector.shape_cast %47 : vector<64x32xf32> to vector<8x8x32xf32>
    %c0_30 = arith.constant 0 : index
    %c0_31 = arith.constant 0 : index
    %c0_32 = arith.constant 0 : index
    %49 = vector.load %arg9[%c0_30, %c0_31, %c0_32] : memref<8x8x32xf32, #tpu.memory_space<vmem>>, vector<8x8x32xf32>
    tpu.vector_store %arg9[%c0_30, %c0_31, %c0_32], %48 {strides = array<i32>} : memref<8x8x32xf32, #tpu.memory_space<vmem>>, vector<8x8x32xf32>,
    return
  }
  func.func @transform_0(%arg0: i32) -> (i32, i32, i32) {
    %c0_i32 = arith.constant 0 : i32
    %c0_i32_0 = arith.constant 0 : i32
    %c0_i32_1 = arith.constant 0 : i32
    return %arg0, %c0_i32, %c0_i32_0 : i32, i32, i32
  }
  func.func @transform_1(%arg0: i32) -> (i32, i32, i32) {
    %c0_i32 = arith.constant 0 : i32
    %c0_i32_0 = arith.constant 0 : i32
    %c0_i32_1 = arith.constant 0 : i32
    return %arg0, %c0_i32, %c0_i32_0 : i32, i32, i32
  }
  func.func @transform_2(%arg0: i32) -> (i32, i32, i32) {
    %c0_i32 = arith.constant 0 : i32
    %c0_i32_0 = arith.constant 0 : i32
    %c0_i32_1 = arith.constant 0 : i32
    return %arg0, %c0_i32, %c0_i32_0 : i32, i32, i32
  }
  func.func @transform_3(%arg0: i32) -> (i32, i32, i32) {
    %c0_i32 = arith.constant 0 : i32
    %c0_i32_0 = arith.constant 0 : i32
    %c0_i32_1 = arith.constant 0 : i32
    %c0_i32_2 = arith.constant 0 : i32
    return %c0_i32, %c0_i32_0, %c0_i32_1 : i32, i32, i32
  }
  func.func @transform_4(%arg0: i32) -> (i32, i32, i32) {
    %c0_i32 = arith.constant 0 : i32
    %c0_i32_0 = arith.constant 0 : i32
    %c0_i32_1 = arith.constant 0 : i32
    %c0_i32_2 = arith.constant 0 : i32
    return %c0_i32, %c0_i32_0, %c0_i32_1 : i32, i32, i32
  }
  func.func @transform_5(%arg0: i32) -> (i32, i32, i32) {
    %c0_i32 = arith.constant 0 : i32
    %c0_i32_0 = arith.constant 0 : i32
    %c0_i32_1 = arith.constant 0 : i32
    %c0_i32_2 = arith.constant 0 : i32
    return %c0_i32, %c0_i32_0, %c0_i32_1 : i32, i32, i32
  }
  func.func @transform_6(%arg0: i32) -> (i32, i32, i32) {
    %c0_i32 = arith.constant 0 : i32
    %c0_i32_0 = arith.constant 0 : i32
    %c0_i32_1 = arith.constant 0 : i32
    %c0_i32_2 = arith.constant 0 : i32
    return %c0_i32, %c0_i32_0, %c0_i32_1 : i32, i32, i32
  }
  func.func @transform_7(%arg0: i32) -> (i32, i32) {
    %c0_i32 = arith.constant 0 : i32
    %c0_i32_0 = arith.constant 0 : i32
    %c0_i32_1 = arith.constant 0 : i32
    return %c0_i32, %c0_i32_0 : i32, i32
  }
  func.func @transform_8(%arg0: i32) -> (i32, i32, i32) {
    %c0_i32 = arith.constant 0 : i32
    %c0_i32_0 = arith.constant 0 : i32
    %c0_i32_1 = arith.constant 0 : i32
    return %arg0, %c0_i32, %c0_i32_0 : i32, i32, i32
  }
}

</mosaic_0001>

<llo_original>
// kernel: tpu_custom_call.1
$region0: #{tpu_custom_call.1}
  #allocation0 [shape = 'u32[]', space=smem, size = 0x4, offset = 0x4, fixed_abs, tag = 'smem constant byte address 0x4 - core index']
  #allocation1 [shape = 'u32[72,128]{1,0:T(1,128)}', space=vmem, size = 0x9000, scoped, tag = 'internal scratch']
  %s0 = inlined_call_operand.vmem [shape: bf16[8,8,32], index: 0, kind: input, shape index: {}]
  %s1 = inlined_call_operand.vmem [shape: bf16[8,16,32], index: 1, kind: input, shape index: {}]
  %s2 = inlined_call_operand.vmem [shape: bf16[8,16,32], index: 2, kind: input, shape index: {}]
  %s3 = inlined_call_operand.vmem [shape: bf16[4,32,8], index: 3, kind: input, shape index: {}]
  %s4 = inlined_call_operand.vmem [shape: bf16[4,32,8], index: 4, kind: input, shape index: {}]
  %s5 = inlined_call_operand.vmem [shape: bf16[4,32,8], index: 5, kind: input, shape index: {}]
  %s6 = inlined_call_operand.vmem [shape: bf16[4,8,32], index: 6, kind: input, shape index: {}]
  %s7 = inlined_call_operand.vmem [shape: f32[1,32], index: 7, kind: input, shape index: {}]
  %s8 = inlined_call_operand.hbm [shape: f32[8,8,32], index: 8, kind: output, shape index: {}]
  %s9 = sld [smem:[#allocation0]]
  $region42: #{tpu_custom_call.1} parent=0
    _
  %s11 = ssub.s32 1, %s9
  %s12 = scalar_select 0, %s11, %s9
  $region1: #{tpu_custom_call.1} parent=0
    #allocation2 [shape = 'u8[32768]{0}', space=vmem, size = 0x8000, scoped, tag = 'output window, operand 0, single buffered']
    #allocation3 [shape = 's32[1]{0}', space=sflag, size = 0x4, scoped, tag = 'scoped memory for tpu_custom_call.1']
    %13 = vsyncpa [#allocation3], 0
    // Predicated region
    $region2: #{tpu_custom_call.1} parent=1 // pred_check
      _
    $region3: #{tpu_custom_call.1} parent=1 // pred_check_branch
      %15 = sbr.rel (0) target = $region5
    $region4: #{tpu_custom_call.1} parent=1 // pred_region
      _
    $region5: #{tpu_custom_call.1} parent=1 // pred_fallthru
      _
    // Predicated region
    $region6: #{tpu_custom_call.1} parent=1 // pred_check
      _
    $region7: #{tpu_custom_call.1} parent=1 // pred_check_branch
      %17 = sbr.rel (0) target = $region9
    $region8: #{tpu_custom_call.1} parent=1 // pred_region
      _
    $region9: #{tpu_custom_call.1} parent=1 // pred_fallthru
      _
    // Predicated region
    $region10: #{tpu_custom_call.1} parent=1 // pred_check
      _
    $region11: #{tpu_custom_call.1} parent=1 // pred_check_branch
      %19 = sbr.rel (0) target = $region13
    $region12: #{tpu_custom_call.1} parent=1 // pred_region
      _
    $region13: #{tpu_custom_call.1} parent=1 // pred_fallthru
      _
    // Predicated region
    $region14: #{tpu_custom_call.1} parent=1 // pred_check
      _
    $region15: #{tpu_custom_call.1} parent=1 // pred_check_branch
      %21 = sbr.rel (0) target = $region17
    $region16: #{tpu_custom_call.1} parent=1 // pred_region
      _
    $region17: #{tpu_custom_call.1} parent=1 // pred_fallthru
      _
    // Predicated region
    $region18: #{tpu_custom_call.1} parent=1 // pred_check
      _
    $region19: #{tpu_custom_call.1} parent=1 // pred_check_branch
      %23 = sbr.rel (0) target = $region21
    $region20: #{tpu_custom_call.1} parent=1 // pred_region
      _
    $region21: #{tpu_custom_call.1} parent=1 // pred_fallthru
      _
    // Predicated region
    $region22: #{tpu_custom_call.1} parent=1 // pred_check
      _
    $region23: #{tpu_custom_call.1} parent=1 // pred_check_branch
      %25 = sbr.rel (0) target = $region25
    $region24: #{tpu_custom_call.1} parent=1 // pred_region
      _
    $region25: #{tpu_custom_call.1} parent=1 // pred_fallthru
      _
    // Predicated region
    $region26: #{tpu_custom_call.1} parent=1 // pred_check
      _
    $region27: #{tpu_custom_call.1} parent=1 // pred_check_branch
      %27 = sbr.rel (0) target = $region29
    $region28: #{tpu_custom_call.1} parent=1 // pred_region
      _
    $region29: #{tpu_custom_call.1} parent=1 // pred_fallthru
      _
    // Predicated region
    $region30: #{tpu_custom_call.1} parent=1 // pred_check
      _
    $region31: #{tpu_custom_call.1} parent=1 // pred_check_branch
      %29 = sbr.rel (0) target = $region33
    $region32: #{tpu_custom_call.1} parent=1 // pred_region
      _
    $region33: #{tpu_custom_call.1} parent=1 // pred_fallthru
      _
    %v31 = vld [vmem:[%s0] sm:$0xf]
    %v32 = vld [vmem:[%s0 + $0x4] sm:$0xf]
    %v33 = vld [vmem:[%s0 + $0x8] sm:$0xf]
    %v34 = vld [vmem:[%s0 + $0xc] sm:$0xf]
    %v35 = vld [vmem:[%s0 + $0x10] sm:$0xf]
    %v36 = vld [vmem:[%s0 + $0x14] sm:$0xf]
    %v37 = vld [vmem:[%s0 + $0x18] sm:$0xf]
    %v38 = vld [vmem:[%s0 + $0x1c] sm:$0xf]
    %v39 = vld [vmem:[%s1] sm:$0xf]
    %v40 = vld [vmem:[%s1 + $0x4] sm:$0xf]
    %v41 = vld [vmem:[%s1 + $0x8] sm:$0xf]
    %v42 = vld [vmem:[%s1 + $0xc] sm:$0xf]
    %v43 = vld [vmem:[%s1 + $0x10] sm:$0xf]
    %v44 = vld [vmem:[%s1 + $0x14] sm:$0xf]
    %v45 = vld [vmem:[%s1 + $0x18] sm:$0xf]
    %v46 = vld [vmem:[%s1 + $0x1c] sm:$0xf]
    %v47 = vld [vmem:[%s1 + $0x20] sm:$0xf]
    %v48 = vld [vmem:[%s1 + $0x24] sm:$0xf]
    %v49 = vld [vmem:[%s1 + $0x28] sm:$0xf]
    %v50 = vld [vmem:[%s1 + $0x2c] sm:$0xf]
    %v51 = vld [vmem:[%s1 + $0x30] sm:$0xf]
    %v52 = vld [vmem:[%s1 + $0x34] sm:$0xf]
    %v53 = vld [vmem:[%s1 + $0x38] sm:$0xf]
    %v54 = vld [vmem:[%s1 + $0x3c] sm:$0xf]
    %v55 = vld [vmem:[%s2] sm:$0xf]
    %v56 = vld [vmem:[%s2 + $0x4] sm:$0xf]
    %v57 = vld [vmem:[%s2 + $0x8] sm:$0xf]
    %v58 = vld [vmem:[%s2 + $0xc] sm:$0xf]
    %v59 = vld [vmem:[%s2 + $0x10] sm:$0xf]
    %v60 = vld [vmem:[%s2 + $0x14] sm:$0xf]
    %v61 = vld [vmem:[%s2 + $0x18] sm:$0xf]
    %v62 = vld [vmem:[%s2 + $0x1c] sm:$0xf]
    %v63 = vld [vmem:[%s2 + $0x20] sm:$0xf]
    %v64 = vld [vmem:[%s2 + $0x24] sm:$0xf]
    %v65 = vld [vmem:[%s2 + $0x28] sm:$0xf]
    %v66 = vld [vmem:[%s2 + $0x2c] sm:$0xf]
    %v67 = vld [vmem:[%s2 + $0x30] sm:$0xf]
    %v68 = vld [vmem:[%s2 + $0x34] sm:$0xf]
    %v69 = vld [vmem:[%s2 + $0x38] sm:$0xf]
    %v70 = vld [vmem:[%s2 + $0x3c] sm:$0xf]
    %v71 = vld [vmem:[%s3] sm:$0xf]
    %v72 = vld [vmem:[%s3 + $0x4] sm:$0xf]
    %v73 = vld [vmem:[%s3 + $0x8] sm:$0xf]
    %v74 = vld [vmem:[%s3 + $0xc] sm:$0xf]
    %v75 = vld [vmem:[%s3 + $0x10] sm:$0xf]
    %v76 = vld [vmem:[%s3 + $0x14] sm:$0xf]
    %v77 = vld [vmem:[%s3 + $0x18] sm:$0xf]
    %v78 = vld [vmem:[%s3 + $0x1c] sm:$0xf]
    %v79 = vld [vmem:[%s3 + $0x20] sm:$0xf]
    %v80 = vld [vmem:[%s3 + $0x24] sm:$0xf]
    %v81 = vld [vmem:[%s3 + $0x28] sm:$0xf]
    %v82 = vld [vmem:[%s3 + $0x2c] sm:$0xf]
    %v83 = vld [vmem:[%s3 + $0x30] sm:$0xf]
    %v84 = vld [vmem:[%s3 + $0x34] sm:$0xf]
    %v85 = vld [vmem:[%s3 + $0x38] sm:$0xf]
    %v86 = vld [vmem:[%s3 + $0x3c] sm:$0xf]
    %v95 = vunpack.c.l.b16 %v31
    %v96 = vunpack.c.l.b16 %v32
    %v97 = vunpack.c.l.b16 %v33
    %v98 = vunpack.c.l.b16 %v34
    %v99 = vunpack.c.l.b16 %v35
    %v100 = vunpack.c.l.b16 %v36
    %v101 = vunpack.c.l.b16 %v37
    %v102 = vunpack.c.l.b16 %v38
    %v103 = vpack.c.b16 %v96, %v95
    %v104 = vpack.c.b16 %v98, %v97
    %v105 = vpack.c.b16 %v100, %v99
    %v106 = vpack.c.b16 %v102, %v101
    %v111 = vunpack.c.l.b16 %v71
    %v112 = vunpack.c.l.b16 %v72
    %v113 = vunpack.c.l.b16 %v73
    %v114 = vunpack.c.l.b16 %v74
    %v115 = vpack.c.b16 %v112, %v111
    %v116 = vpack.c.b16 %v114, %v113
    %vm119 = vcmask 261120
    %v121 = vsel %vm119, %v103, 0
    %v124 = vsel %vm119, %v104, 0
    %v127 = vsel %vm119, %v105, 0
    %v130 = vsel %vm119, %v106, 0
    %132 = vmatpush.bf16.msra.mxu0 0
    %133 = vmatpush.bf16.msra.mxu0 0
    %134 = vmatpush.bf16.msra.mxu0 0
    %135 = vmatpush.bf16.msra.mxu0 0
    %136 = vmatpush.bf16.msra.mxu0 0
    %137 = vmatpush.bf16.msra.mxu0 0
    %138 = vmatpush.bf16.msra.mxu0 %v116
    %139 = vmatpush.bf16.msra.mxu0 %v115
    %140 = vmatmul.bf16.gmra.mxu0 %v121
    %v141 = vpop.f32.mrf.mxu0
    %v142 = vadd.f32 0.0, %v141
    %v143 = vpop.f32.mrf.mxu0
    %v144 = vadd.f32 0.0, %v143
    %145 = vmatmul.bf16.gmra.mxu0 %v124
    %v146 = vpop.f32.mrf.mxu0
    %v147 = vadd.f32 0.0, %v146
    %v148 = vpop.f32.mrf.mxu0
    %v149 = vadd.f32 0.0, %v148
    %150 = vmatmul.bf16.gmra.mxu0 %v127
    %v151 = vpop.f32.mrf.mxu0
    %v152 = vadd.f32 0.0, %v151
    %v153 = vpop.f32.mrf.mxu0
    %v154 = vadd.f32 0.0, %v153
    %155 = vmatmul.bf16.gmra.mxu0 %v130
    %v156 = vpop.f32.mrf.mxu0
    %v157 = vadd.f32 0.0, %v156
    %v158 = vpop.f32.mrf.mxu0
    %v159 = vadd.f32 0.0, %v158
    %160 = vdwg.mxu0
    %v165 = vunpack.c.l.b16 %v75
    %v166 = vunpack.c.l.b16 %v76
    %v167 = vunpack.c.l.b16 %v77
    %v168 = vunpack.c.l.b16 %v78
    %v169 = vpack.c.b16 %v166, %v165
    %v170 = vpack.c.b16 %v168, %v167
    %173 = vmatpush.bf16.msra.mxu0 0
    %174 = vmatpush.bf16.msra.mxu0 0
    %175 = vmatpush.bf16.msra.mxu0 0
    %176 = vmatpush.bf16.msra.mxu0 0
    %177 = vmatpush.bf16.msra.mxu0 0
    %178 = vmatpush.bf16.msra.mxu0 0
    %179 = vmatpush.bf16.msra.mxu0 %v170
    %180 = vmatpush.bf16.msra.mxu0 %v169
    %181 = vmatmul.bf16.gmra.mxu0 %v121
    %v182 = vpop.f32.mrf.mxu0
    %v183 = vadd.f32 0.0, %v182
    %v184 = vpop.f32.mrf.mxu0
    %v185 = vadd.f32 0.0, %v184
    %186 = vmatmul.bf16.gmra.mxu0 %v124
    %v187 = vpop.f32.mrf.mxu0
    %v188 = vadd.f32 0.0, %v187
    %v189 = vpop.f32.mrf.mxu0
    %v190 = vadd.f32 0.0, %v189
    %191 = vmatmul.bf16.gmra.mxu0 %v127
    %v192 = vpop.f32.mrf.mxu0
    %v193 = vadd.f32 0.0, %v192
    %v194 = vpop.f32.mrf.mxu0
    %v195 = vadd.f32 0.0, %v194
    %196 = vmatmul.bf16.gmra.mxu0 %v130
    %v197 = vpop.f32.mrf.mxu0
    %v198 = vadd.f32 0.0, %v197
    %v199 = vpop.f32.mrf.mxu0
    %v200 = vadd.f32 0.0, %v199
    %201 = vdwg.mxu0
    %v206 = vunpack.c.l.b16 %v79
    %v207 = vunpack.c.l.b16 %v80
    %v208 = vunpack.c.l.b16 %v81
    %v209 = vunpack.c.l.b16 %v82
    %v210 = vpack.c.b16 %v207, %v206
    %v211 = vpack.c.b16 %v209, %v208
    %214 = vmatpush.bf16.msra.mxu0 0
    %215 = vmatpush.bf16.msra.mxu0 0
    %216 = vmatpush.bf16.msra.mxu0 0
    %217 = vmatpush.bf16.msra.mxu0 0
    %218 = vmatpush.bf16.msra.mxu0 0
    %219 = vmatpush.bf16.msra.mxu0 0
    %220 = vmatpush.bf16.msra.mxu0 %v211
    %221 = vmatpush.bf16.msra.mxu0 %v210
    %222 = vmatmul.bf16.gmra.mxu0 %v121
    %v223 = vpop.f32.mrf.mxu0
    %v224 = vadd.f32 0.0, %v223
    %v225 = vpop.f32.mrf.mxu0
    %v226 = vadd.f32 0.0, %v225
    %227 = vmatmul.bf16.gmra.mxu0 %v124
    %v228 = vpop.f32.mrf.mxu0
    %v229 = vadd.f32 0.0, %v228
    %v230 = vpop.f32.mrf.mxu0
    %v231 = vadd.f32 0.0, %v230
    %232 = vmatmul.bf16.gmra.mxu0 %v127
    %v233 = vpop.f32.mrf.mxu0
    %v234 = vadd.f32 0.0, %v233
    %v235 = vpop.f32.mrf.mxu0
    %v236 = vadd.f32 0.0, %v235
    %237 = vmatmul.bf16.gmra.mxu0 %v130
    %v238 = vpop.f32.mrf.mxu0
    %v239 = vadd.f32 0.0, %v238
    %v240 = vpop.f32.mrf.mxu0
    %v241 = vadd.f32 0.0, %v240
    %242 = vdwg.mxu0
    %v247 = vunpack.c.l.b16 %v83
    %v248 = vunpack.c.l.b16 %v84
    %v249 = vunpack.c.l.b16 %v85
    %v250 = vunpack.c.l.b16 %v86
    %v251 = vpack.c.b16 %v248, %v247
    %v252 = vpack.c.b16 %v250, %v249
    %255 = vmatpush.bf16.msra.mxu0 0
    %256 = vmatpush.bf16.msra.mxu0 0
    %257 = vmatpush.bf16.msra.mxu0 0
    %258 = vmatpush.bf16.msra.mxu0 0
    %259 = vmatpush.bf16.msra.mxu0 0
    %260 = vmatpush.bf16.msra.mxu0 0
    %261 = vmatpush.bf16.msra.mxu0 %v252
    %262 = vmatpush.bf16.msra.mxu0 %v251
    %263 = vmatmul.bf16.gmra.mxu0 %v121
    %v264 = vpop.f32.mrf.mxu0
    %v265 = vadd.f32 0.0, %v264
    %v266 = vpop.f32.mrf.mxu0
    %v267 = vadd.f32 0.0, %v266
    %268 = vmatmul.bf16.gmra.mxu0 %v124
    %v269 = vpop.f32.mrf.mxu0
    %v270 = vadd.f32 0.0, %v269
    %v271 = vpop.f32.mrf.mxu0
    %v272 = vadd.f32 0.0, %v271
    %273 = vmatmul.bf16.gmra.mxu0 %v127
    %v274 = vpop.f32.mrf.mxu0
    %v275 = vadd.f32 0.0, %v274
    %v276 = vpop.f32.mrf.mxu0
    %v277 = vadd.f32 0.0, %v276
    %278 = vmatmul.bf16.gmra.mxu0 %v130
    %v279 = vpop.f32.mrf.mxu0
    %v280 = vadd.f32 0.0, %v279
    %v281 = vpop.f32.mrf.mxu0
    %v282 = vadd.f32 0.0, %v281
    %283 = vdwg.mxu0
    %v284 = vld [vmem:[%s4] sm:$0xf]
    %v285 = vld [vmem:[%s4 + $0x4] sm:$0xf]
    %v286 = vld [vmem:[%s4 + $0x8] sm:$0xf]
    %v287 = vld [vmem:[%s4 + $0xc] sm:$0xf]
    %v288 = vld [vmem:[%s4 + $0x10] sm:$0xf]
    %v289 = vld [vmem:[%s4 + $0x14] sm:$0xf]
    %v290 = vld [vmem:[%s4 + $0x18] sm:$0xf]
    %v291 = vld [vmem:[%s4 + $0x1c] sm:$0xf]
    %v292 = vld [vmem:[%s4 + $0x20] sm:$0xf]
    %v293 = vld [vmem:[%s4 + $0x24] sm:$0xf]
    %v294 = vld [vmem:[%s4 + $0x28] sm:$0xf]
    %v295 = vld [vmem:[%s4 + $0x2c] sm:$0xf]
    %v296 = vld [vmem:[%s4 + $0x30] sm:$0xf]
    %v297 = vld [vmem:[%s4 + $0x34] sm:$0xf]
    %v298 = vld [vmem:[%s4 + $0x38] sm:$0xf]
    %v299 = vld [vmem:[%s4 + $0x3c] sm:$0xf]
    %v316 = vunpack.c.l.b16 %v39
    %v317 = vunpack.c.l.b16 %v40
    %v318 = vunpack.c.l.b16 %v41
    %v319 = vunpack.c.l.b16 %v42
    %v320 = vunpack.c.l.b16 %v43
    %v321 = vunpack.c.l.b16 %v44
    %v322 = vunpack.c.l.b16 %v45
    %v323 = vunpack.c.l.b16 %v46
    %v324 = vunpack.c.l.b16 %v47
    %v325 = vunpack.c.l.b16 %v48
    %v326 = vunpack.c.l.b16 %v49
    %v327 = vunpack.c.l.b16 %v50
    %v328 = vunpack.c.l.b16 %v51
    %v329 = vunpack.c.l.b16 %v52
    %v330 = vunpack.c.l.b16 %v53
    %v331 = vunpack.c.l.b16 %v54
    %v332 = vpack.c.b16 %v317, %v316
    %v333 = vpack.c.b16 %v319, %v318
    %v334 = vpack.c.b16 %v321, %v320
    %v335 = vpack.c.b16 %v323, %v322
    %v336 = vpack.c.b16 %v325, %v324
    %v337 = vpack.c.b16 %v327, %v326
    %v338 = vpack.c.b16 %v329, %v328
    %v339 = vpack.c.b16 %v331, %v330
    %v344 = vunpack.c.l.b16 %v284
    %v345 = vunpack.c.l.b16 %v285
    %v346 = vunpack.c.l.b16 %v286
    %v347 = vunpack.c.l.b16 %v287
    %v348 = vpack.c.b16 %v345, %v344
    %v349 = vpack.c.b16 %v347, %v346
    %v353 = vsel %vm119, %v332, 0
    %v356 = vsel %vm119, %v333, 0
    %v359 = vsel %vm119, %v334, 0
    %v362 = vsel %vm119, %v335, 0
    %v365 = vsel %vm119, %v336, 0
    %v368 = vsel %vm119, %v337, 0
    %v371 = vsel %vm119, %v338, 0
    %v374 = vsel %vm119, %v339, 0
    %376 = vmatpush.bf16.msra.mxu0 0
    %377 = vmatpush.bf16.msra.mxu0 0
    %378 = vmatpush.bf16.msra.mxu0 0
    %379 = vmatpush.bf16.msra.mxu0 0
    %380 = vmatpush.bf16.msra.mxu0 0
    %381 = vmatpush.bf16.msra.mxu0 0
    %382 = vmatpush.bf16.msra.mxu0 %v349
    %383 = vmatpush.bf16.msra.mxu0 %v348
    %384 = vmatmul.bf16.gmra.mxu0 %v353
    %v385 = vpop.f32.mrf.mxu0
    %v386 = vadd.f32 0.0, %v385
    %v387 = vpop.f32.mrf.mxu0
    %v388 = vadd.f32 0.0, %v387
    %389 = vmatmul.bf16.gmra.mxu0 %v356
    %v390 = vpop.f32.mrf.mxu0
    %v391 = vadd.f32 0.0, %v390
    %v392 = vpop.f32.mrf.mxu0
    %v393 = vadd.f32 0.0, %v392
    %394 = vmatmul.bf16.gmra.mxu0 %v359
    %v395 = vpop.f32.mrf.mxu0
    %v396 = vadd.f32 0.0, %v395
    %v397 = vpop.f32.mrf.mxu0
    %v398 = vadd.f32 0.0, %v397
    %399 = vmatmul.bf16.gmra.mxu0 %v362
    %v400 = vpop.f32.mrf.mxu0
    %v401 = vadd.f32 0.0, %v400
    %v402 = vpop.f32.mrf.mxu0
    %v403 = vadd.f32 0.0, %v402
    %404 = vmatmul.bf16.gmra.mxu0 %v365
    %v405 = vpop.f32.mrf.mxu0
    %v406 = vadd.f32 0.0, %v405
    %v407 = vpop.f32.mrf.mxu0
    %v408 = vadd.f32 0.0, %v407
    %409 = vmatmul.bf16.gmra.mxu0 %v368
    %v410 = vpop.f32.mrf.mxu0
    %v411 = vadd.f32 0.0, %v410
    %v412 = vpop.f32.mrf.mxu0
    %v413 = vadd.f32 0.0, %v412
    %414 = vmatmul.bf16.gmra.mxu0 %v371
    %v415 = vpop.f32.mrf.mxu0
    %v416 = vadd.f32 0.0, %v415
    %v417 = vpop.f32.mrf.mxu0
    %v418 = vadd.f32 0.0, %v417
    %419 = vmatmul.bf16.gmra.mxu0 %v374
    %v420 = vpop.f32.mrf.mxu0
    %v421 = vadd.f32 0.0, %v420
    %v422 = vpop.f32.mrf.mxu0
    %v423 = vadd.f32 0.0, %v422
    %424 = vdwg.mxu0
    %v429 = vunpack.c.l.b16 %v288
    %v430 = vunpack.c.l.b16 %v289
    %v431 = vunpack.c.l.b16 %v290
    %v432 = vunpack.c.l.b16 %v291
    %v433 = vpack.c.b16 %v430, %v429
    %v434 = vpack.c.b16 %v432, %v431
    %437 = vmatpush.bf16.msra.mxu0 0
    %438 = vmatpush.bf16.msra.mxu0 0
    %439 = vmatpush.bf16.msra.mxu0 0
    %440 = vmatpush.bf16.msra.mxu0 0
    %441 = vmatpush.bf16.msra.mxu0 0
    %442 = vmatpush.bf16.msra.mxu0 0
    %443 = vmatpush.bf16.msra.mxu0 %v434
    %444 = vmatpush.bf16.msra.mxu0 %v433
    %445 = vmatmul.bf16.gmra.mxu0 %v353
    %v446 = vpop.f32.mrf.mxu0
    %v447 = vadd.f32 0.0, %v446
    %v448 = vpop.f32.mrf.mxu0
    %v449 = vadd.f32 0.0, %v448
    %450 = vmatmul.bf16.gmra.mxu0 %v356
    %v451 = vpop.f32.mrf.mxu0
    %v452 = vadd.f32 0.0, %v451
    %v453 = vpop.f32.mrf.mxu0
    %v454 = vadd.f32 0.0, %v453
    %455 = vmatmul.bf16.gmra.mxu0 %v359
    %v456 = vpop.f32.mrf.mxu0
    %v457 = vadd.f32 0.0, %v456
    %v458 = vpop.f32.mrf.mxu0
    %v459 = vadd.f32 0.0, %v458
    %460 = vmatmul.bf16.gmra.mxu0 %v362
    %v461 = vpop.f32.mrf.mxu0
    %v462 = vadd.f32 0.0, %v461
    %v463 = vpop.f32.mrf.mxu0
    %v464 = vadd.f32 0.0, %v463
    %465 = vmatmul.bf16.gmra.mxu0 %v365
    %v466 = vpop.f32.mrf.mxu0
    %v467 = vadd.f32 0.0, %v466
    %v468 = vpop.f32.mrf.mxu0
    %v469 = vadd.f32 0.0, %v468
    %470 = vmatmul.bf16.gmra.mxu0 %v368
    %v471 = vpop.f32.mrf.mxu0
    %v472 = vadd.f32 0.0, %v471
    %v473 = vpop.f32.mrf.mxu0
    %v474 = vadd.f32 0.0, %v473
    %475 = vmatmul.bf16.gmra.mxu0 %v371
    %v476 = vpop.f32.mrf.mxu0
    %v477 = vadd.f32 0.0, %v476
    %v478 = vpop.f32.mrf.mxu0
    %v479 = vadd.f32 0.0, %v478
    %480 = vmatmul.bf16.gmra.mxu0 %v374
    %v481 = vpop.f32.mrf.mxu0
    %v482 = vadd.f32 0.0, %v481
    %v483 = vpop.f32.mrf.mxu0
    %v484 = vadd.f32 0.0, %v483
    %485 = vdwg.mxu0
    %v490 = vunpack.c.l.b16 %v292
    %v491 = vunpack.c.l.b16 %v293
    %v492 = vunpack.c.l.b16 %v294
    %v493 = vunpack.c.l.b16 %v295
    %v494 = vpack.c.b16 %v491, %v490
    %v495 = vpack.c.b16 %v493, %v492
    %498 = vmatpush.bf16.msra.mxu0 0
    %499 = vmatpush.bf16.msra.mxu0 0
    %500 = vmatpush.bf16.msra.mxu0 0
    %501 = vmatpush.bf16.msra.mxu0 0
    %502 = vmatpush.bf16.msra.mxu0 0
    %503 = vmatpush.bf16.msra.mxu0 0
    %504 = vmatpush.bf16.msra.mxu0 %v495
    %505 = vmatpush.bf16.msra.mxu0 %v494
    %506 = vmatmul.bf16.gmra.mxu0 %v353
    %v507 = vpop.f32.mrf.mxu0
    %v508 = vadd.f32 0.0, %v507
    %v509 = vpop.f32.mrf.mxu0
    %v510 = vadd.f32 0.0, %v509
    %511 = vmatmul.bf16.gmra.mxu0 %v356
    %v512 = vpop.f32.mrf.mxu0
    %v513 = vadd.f32 0.0, %v512
    %v514 = vpop.f32.mrf.mxu0
    %v515 = vadd.f32 0.0, %v514
    %516 = vmatmul.bf16.gmra.mxu0 %v359
    %v517 = vpop.f32.mrf.mxu0
    %v518 = vadd.f32 0.0, %v517
    %v519 = vpop.f32.mrf.mxu0
    %v520 = vadd.f32 0.0, %v519
    %521 = vmatmul.bf16.gmra.mxu0 %v362
    %v522 = vpop.f32.mrf.mxu0
    %v523 = vadd.f32 0.0, %v522
    %v524 = vpop.f32.mrf.mxu0
    %v525 = vadd.f32 0.0, %v524
    %526 = vmatmul.bf16.gmra.mxu0 %v365
    %v527 = vpop.f32.mrf.mxu0
    %v528 = vadd.f32 0.0, %v527
    %v529 = vpop.f32.mrf.mxu0
    %v530 = vadd.f32 0.0, %v529
    %531 = vmatmul.bf16.gmra.mxu0 %v368
    %v532 = vpop.f32.mrf.mxu0
    %v533 = vadd.f32 0.0, %v532
    %v534 = vpop.f32.mrf.mxu0
    %v535 = vadd.f32 0.0, %v534
    %536 = vmatmul.bf16.gmra.mxu0 %v371
    %v537 = vpop.f32.mrf.mxu0
    %v538 = vadd.f32 0.0, %v537
    %v539 = vpop.f32.mrf.mxu0
    %v540 = vadd.f32 0.0, %v539
    %541 = vmatmul.bf16.gmra.mxu0 %v374
    %v542 = vpop.f32.mrf.mxu0
    %v543 = vadd.f32 0.0, %v542
    %v544 = vpop.f32.mrf.mxu0
    %v545 = vadd.f32 0.0, %v544
    %546 = vdwg.mxu0
    %v551 = vunpack.c.l.b16 %v296
    %v552 = vunpack.c.l.b16 %v297
    %v553 = vunpack.c.l.b16 %v298
    %v554 = vunpack.c.l.b16 %v299
    %v555 = vpack.c.b16 %v552, %v551
    %v556 = vpack.c.b16 %v554, %v553
    %559 = vmatpush.bf16.msra.mxu0 0
    %560 = vmatpush.bf16.msra.mxu0 0
    %561 = vmatpush.bf16.msra.mxu0 0
    %562 = vmatpush.bf16.msra.mxu0 0
    %563 = vmatpush.bf16.msra.mxu0 0
    %564 = vmatpush.bf16.msra.mxu0 0
    %565 = vmatpush.bf16.msra.mxu0 %v556
    %566 = vmatpush.bf16.msra.mxu0 %v555
    %567 = vmatmul.bf16.gmra.mxu0 %v353
    %v568 = vpop.f32.mrf.mxu0
    %v569 = vadd.f32 0.0, %v568
    %v570 = vpop.f32.mrf.mxu0
    %v571 = vadd.f32 0.0, %v570
    %572 = vmatmul.bf16.gmra.mxu0 %v356
    %v573 = vpop.f32.mrf.mxu0
    %v574 = vadd.f32 0.0, %v573
    %v575 = vpop.f32.mrf.mxu0
    %v576 = vadd.f32 0.0, %v575
    %577 = vmatmul.bf16.gmra.mxu0 %v359
    %v578 = vpop.f32.mrf.mxu0
    %v579 = vadd.f32 0.0, %v578
    %v580 = vpop.f32.mrf.mxu0
    %v581 = vadd.f32 0.0, %v580
    %582 = vmatmul.bf16.gmra.mxu0 %v362
    %v583 = vpop.f32.mrf.mxu0
    %v584 = vadd.f32 0.0, %v583
    %v585 = vpop.f32.mrf.mxu0
    %v586 = vadd.f32 0.0, %v585
    %587 = vmatmul.bf16.gmra.mxu0 %v365
    %v588 = vpop.f32.mrf.mxu0
    %v589 = vadd.f32 0.0, %v588
    %v590 = vpop.f32.mrf.mxu0
    %v591 = vadd.f32 0.0, %v590
    %592 = vmatmul.bf16.gmra.mxu0 %v368
    %v593 = vpop.f32.mrf.mxu0
    %v594 = vadd.f32 0.0, %v593
    %v595 = vpop.f32.mrf.mxu0
    %v596 = vadd.f32 0.0, %v595
    %597 = vmatmul.bf16.gmra.mxu0 %v371
    %v598 = vpop.f32.mrf.mxu0
    %v599 = vadd.f32 0.0, %v598
    %v600 = vpop.f32.mrf.mxu0
    %v601 = vadd.f32 0.0, %v600
    %602 = vmatmul.bf16.gmra.mxu0 %v374
    %v603 = vpop.f32.mrf.mxu0
    %v604 = vadd.f32 0.0, %v603
    %v605 = vpop.f32.mrf.mxu0
    %v606 = vadd.f32 0.0, %v605
    %607 = vdwg.mxu0
    %v608 = vld [vmem:[%s5] sm:$0xf]
    %v609 = vld [vmem:[%s5 + $0x4] sm:$0xf]
    %v610 = vld [vmem:[%s5 + $0x8] sm:$0xf]
    %v611 = vld [vmem:[%s5 + $0xc] sm:$0xf]
    %v612 = vld [vmem:[%s5 + $0x10] sm:$0xf]
    %v613 = vld [vmem:[%s5 + $0x14] sm:$0xf]
    %v614 = vld [vmem:[%s5 + $0x18] sm:$0xf]
    %v615 = vld [vmem:[%s5 + $0x1c] sm:$0xf]
    %v616 = vld [vmem:[%s5 + $0x20] sm:$0xf]
    %v617 = vld [vmem:[%s5 + $0x24] sm:$0xf]
    %v618 = vld [vmem:[%s5 + $0x28] sm:$0xf]
    %v619 = vld [vmem:[%s5 + $0x2c] sm:$0xf]
    %v620 = vld [vmem:[%s5 + $0x30] sm:$0xf]
    %v621 = vld [vmem:[%s5 + $0x34] sm:$0xf]
    %v622 = vld [vmem:[%s5 + $0x38] sm:$0xf]
    %v623 = vld [vmem:[%s5 + $0x3c] sm:$0xf]
    %v640 = vunpack.c.l.b16 %v55
    %v641 = vunpack.c.l.b16 %v56
    %v642 = vunpack.c.l.b16 %v57
    %v643 = vunpack.c.l.b16 %v58
    %v644 = vunpack.c.l.b16 %v59
    %v645 = vunpack.c.l.b16 %v60
    %v646 = vunpack.c.l.b16 %v61
    %v647 = vunpack.c.l.b16 %v62
    %v648 = vunpack.c.l.b16 %v63
    %v649 = vunpack.c.l.b16 %v64
    %v650 = vunpack.c.l.b16 %v65
    %v651 = vunpack.c.l.b16 %v66
    %v652 = vunpack.c.l.b16 %v67
    %v653 = vunpack.c.l.b16 %v68
    %v654 = vunpack.c.l.b16 %v69
    %v655 = vunpack.c.l.b16 %v70
    %v656 = vpack.c.b16 %v641, %v640
    %v657 = vpack.c.b16 %v643, %v642
    %v658 = vpack.c.b16 %v645, %v644
    %v659 = vpack.c.b16 %v647, %v646
    %v660 = vpack.c.b16 %v649, %v648
    %v661 = vpack.c.b16 %v651, %v650
    %v662 = vpack.c.b16 %v653, %v652
    %v663 = vpack.c.b16 %v655, %v654
    %v668 = vunpack.c.l.b16 %v608
    %v669 = vunpack.c.l.b16 %v609
    %v670 = vunpack.c.l.b16 %v610
    %v671 = vunpack.c.l.b16 %v611
    %v672 = vpack.c.b16 %v669, %v668
    %v673 = vpack.c.b16 %v671, %v670
    %v677 = vsel %vm119, %v656, 0
    %v680 = vsel %vm119, %v657, 0
    %v683 = vsel %vm119, %v658, 0
    %v686 = vsel %vm119, %v659, 0
    %v689 = vsel %vm119, %v660, 0
    %v692 = vsel %vm119, %v661, 0
    %v695 = vsel %vm119, %v662, 0
    %v698 = vsel %vm119, %v663, 0
    %700 = vmatpush.bf16.msra.mxu0 0
    %701 = vmatpush.bf16.msra.mxu0 0
    %702 = vmatpush.bf16.msra.mxu0 0
    %703 = vmatpush.bf16.msra.mxu0 0
    %704 = vmatpush.bf16.msra.mxu0 0
    %705 = vmatpush.bf16.msra.mxu0 0
    %706 = vmatpush.bf16.msra.mxu0 %v673
    %707 = vmatpush.bf16.msra.mxu0 %v672
    %708 = vmatmul.bf16.gmra.mxu0 %v677
    %v709 = vpop.f32.mrf.mxu0
    %v710 = vadd.f32 0.0, %v709
    %v711 = vpop.f32.mrf.mxu0
    %v712 = vadd.f32 0.0, %v711
    %713 = vmatmul.bf16.gmra.mxu0 %v680
    %v714 = vpop.f32.mrf.mxu0
    %v715 = vadd.f32 0.0, %v714
    %v716 = vpop.f32.mrf.mxu0
    %v717 = vadd.f32 0.0, %v716
    %718 = vmatmul.bf16.gmra.mxu0 %v683
    %v719 = vpop.f32.mrf.mxu0
    %v720 = vadd.f32 0.0, %v719
    %v721 = vpop.f32.mrf.mxu0
    %v722 = vadd.f32 0.0, %v721
    %723 = vmatmul.bf16.gmra.mxu0 %v686
    %v724 = vpop.f32.mrf.mxu0
    %v725 = vadd.f32 0.0, %v724
    %v726 = vpop.f32.mrf.mxu0
    %v727 = vadd.f32 0.0, %v726
    %728 = vmatmul.bf16.gmra.mxu0 %v689
    %v729 = vpop.f32.mrf.mxu0
    %v730 = vadd.f32 0.0, %v729
    %v731 = vpop.f32.mrf.mxu0
    %v732 = vadd.f32 0.0, %v731
    %733 = vmatmul.bf16.gmra.mxu0 %v692
    %v734 = vpop.f32.mrf.mxu0
    %v735 = vadd.f32 0.0, %v734
    %v736 = vpop.f32.mrf.mxu0
    %v737 = vadd.f32 0.0, %v736
    %738 = vmatmul.bf16.gmra.mxu0 %v695
    %v739 = vpop.f32.mrf.mxu0
    %v740 = vadd.f32 0.0, %v739
    %v741 = vpop.f32.mrf.mxu0
    %v742 = vadd.f32 0.0, %v741
    %743 = vmatmul.bf16.gmra.mxu0 %v698
    %v744 = vpop.f32.mrf.mxu0
    %v745 = vadd.f32 0.0, %v744
    %v746 = vpop.f32.mrf.mxu0
    %v747 = vadd.f32 0.0, %v746
    %748 = vdwg.mxu0
    %v753 = vunpack.c.l.b16 %v612
    %v754 = vunpack.c.l.b16 %v613
    %v755 = vunpack.c.l.b16 %v614
    %v756 = vunpack.c.l.b16 %v615
    %v757 = vpack.c.b16 %v754, %v753
    %v758 = vpack.c.b16 %v756, %v755
    %761 = vmatpush.bf16.msra.mxu0 0
    %762 = vmatpush.bf16.msra.mxu0 0
    %763 = vmatpush.bf16.msra.mxu0 0
    %764 = vmatpush.bf16.msra.mxu0 0
    %765 = vmatpush.bf16.msra.mxu0 0
    %766 = vmatpush.bf16.msra.mxu0 0
    %767 = vmatpush.bf16.msra.mxu0 %v758
    %768 = vmatpush.bf16.msra.mxu0 %v757
    %769 = vmatmul.bf16.gmra.mxu0 %v677
    %v770 = vpop.f32.mrf.mxu0
    %v771 = vadd.f32 0.0, %v770
    %v772 = vpop.f32.mrf.mxu0
    %v773 = vadd.f32 0.0, %v772
    %774 = vmatmul.bf16.gmra.mxu0 %v680
    %v775 = vpop.f32.mrf.mxu0
    %v776 = vadd.f32 0.0, %v775
    %v777 = vpop.f32.mrf.mxu0
    %v778 = vadd.f32 0.0, %v777
    %779 = vmatmul.bf16.gmra.mxu0 %v683
    %v780 = vpop.f32.mrf.mxu0
    %v781 = vadd.f32 0.0, %v780
    %v782 = vpop.f32.mrf.mxu0
    %v783 = vadd.f32 0.0, %v782
    %784 = vmatmul.bf16.gmra.mxu0 %v686
    %v785 = vpop.f32.mrf.mxu0
    %v786 = vadd.f32 0.0, %v785
    %v787 = vpop.f32.mrf.mxu0
    %v788 = vadd.f32 0.0, %v787
    %789 = vmatmul.bf16.gmra.mxu0 %v689
    %v790 = vpop.f32.mrf.mxu0
    %v791 = vadd.f32 0.0, %v790
    %v792 = vpop.f32.mrf.mxu0
    %v793 = vadd.f32 0.0, %v792
    %794 = vmatmul.bf16.gmra.mxu0 %v692
    %v795 = vpop.f32.mrf.mxu0
    %v796 = vadd.f32 0.0, %v795
    %v797 = vpop.f32.mrf.mxu0
    %v798 = vadd.f32 0.0, %v797
    %799 = vmatmul.bf16.gmra.mxu0 %v695
    %v800 = vpop.f32.mrf.mxu0
    %v801 = vadd.f32 0.0, %v800
    %v802 = vpop.f32.mrf.mxu0
    %v803 = vadd.f32 0.0, %v802
    %804 = vmatmul.bf16.gmra.mxu0 %v698
    %v805 = vpop.f32.mrf.mxu0
    %v806 = vadd.f32 0.0, %v805
    %v807 = vpop.f32.mrf.mxu0
    %v808 = vadd.f32 0.0, %v807
    %809 = vdwg.mxu0
    %v814 = vunpack.c.l.b16 %v616
    %v815 = vunpack.c.l.b16 %v617
    %v816 = vunpack.c.l.b16 %v618
    %v817 = vunpack.c.l.b16 %v619
    %v818 = vpack.c.b16 %v815, %v814
    %v819 = vpack.c.b16 %v817, %v816
    %822 = vmatpush.bf16.msra.mxu0 0
    %823 = vmatpush.bf16.msra.mxu0 0
    %824 = vmatpush.bf16.msra.mxu0 0
    %825 = vmatpush.bf16.msra.mxu0 0
    %826 = vmatpush.bf16.msra.mxu0 0
    %827 = vmatpush.bf16.msra.mxu0 0
    %828 = vmatpush.bf16.msra.mxu0 %v819
    %829 = vmatpush.bf16.msra.mxu0 %v818
    %830 = vmatmul.bf16.gmra.mxu0 %v677
    %v831 = vpop.f32.mrf.mxu0
    %v832 = vadd.f32 0.0, %v831
    %v833 = vpop.f32.mrf.mxu0
    %v834 = vadd.f32 0.0, %v833
    %835 = vmatmul.bf16.gmra.mxu0 %v680
    %v836 = vpop.f32.mrf.mxu0
    %v837 = vadd.f32 0.0, %v836
    %v838 = vpop.f32.mrf.mxu0
    %v839 = vadd.f32 0.0, %v838
    %840 = vmatmul.bf16.gmra.mxu0 %v683
    %v841 = vpop.f32.mrf.mxu0
    %v842 = vadd.f32 0.0, %v841
    %v843 = vpop.f32.mrf.mxu0
    %v844 = vadd.f32 0.0, %v843
    %845 = vmatmul.bf16.gmra.mxu0 %v686
    %v846 = vpop.f32.mrf.mxu0
    %v847 = vadd.f32 0.0, %v846
    %v848 = vpop.f32.mrf.mxu0
    %v849 = vadd.f32 0.0, %v848
    %850 = vmatmul.bf16.gmra.mxu0 %v689
    %v851 = vpop.f32.mrf.mxu0
    %v852 = vadd.f32 0.0, %v851
    %v853 = vpop.f32.mrf.mxu0
    %v854 = vadd.f32 0.0, %v853
    %855 = vmatmul.bf16.gmra.mxu0 %v692
    %v856 = vpop.f32.mrf.mxu0
    %v857 = vadd.f32 0.0, %v856
    %v858 = vpop.f32.mrf.mxu0
    %v859 = vadd.f32 0.0, %v858
    %860 = vmatmul.bf16.gmra.mxu0 %v695
    %v861 = vpop.f32.mrf.mxu0
    %v862 = vadd.f32 0.0, %v861
    %v863 = vpop.f32.mrf.mxu0
    %v864 = vadd.f32 0.0, %v863
    %865 = vmatmul.bf16.gmra.mxu0 %v698
    %v866 = vpop.f32.mrf.mxu0
    %v867 = vadd.f32 0.0, %v866
    %v868 = vpop.f32.mrf.mxu0
    %v869 = vadd.f32 0.0, %v868
    %870 = vdwg.mxu0
    %v875 = vunpack.c.l.b16 %v620
    %v876 = vunpack.c.l.b16 %v621
    %v877 = vunpack.c.l.b16 %v622
    %v878 = vunpack.c.l.b16 %v623
    %v879 = vpack.c.b16 %v876, %v875
    %v880 = vpack.c.b16 %v878, %v877
    %883 = vmatpush.bf16.msra.mxu0 0
    %884 = vmatpush.bf16.msra.mxu0 0
    %885 = vmatpush.bf16.msra.mxu0 0
    %886 = vmatpush.bf16.msra.mxu0 0
    %887 = vmatpush.bf16.msra.mxu0 0
    %888 = vmatpush.bf16.msra.mxu0 0
    %889 = vmatpush.bf16.msra.mxu0 %v880
    %890 = vmatpush.bf16.msra.mxu0 %v879
    %891 = vmatmul.bf16.gmra.mxu0 %v677
    %v892 = vpop.f32.mrf.mxu0
    %v893 = vadd.f32 0.0, %v892
    %v894 = vpop.f32.mrf.mxu0
    %v895 = vadd.f32 0.0, %v894
    %896 = vmatmul.bf16.gmra.mxu0 %v680
    %v897 = vpop.f32.mrf.mxu0
    %v898 = vadd.f32 0.0, %v897
    %v899 = vpop.f32.mrf.mxu0
    %v900 = vadd.f32 0.0, %v899
    %901 = vmatmul.bf16.gmra.mxu0 %v683
    %v902 = vpop.f32.mrf.mxu0
    %v903 = vadd.f32 0.0, %v902
    %v904 = vpop.f32.mrf.mxu0
    %v905 = vadd.f32 0.0, %v904
    %906 = vmatmul.bf16.gmra.mxu0 %v686
    %v907 = vpop.f32.mrf.mxu0
    %v908 = vadd.f32 0.0, %v907
    %v909 = vpop.f32.mrf.mxu0
    %v910 = vadd.f32 0.0, %v909
    %911 = vmatmul.bf16.gmra.mxu0 %v689
    %v912 = vpop.f32.mrf.mxu0
    %v913 = vadd.f32 0.0, %v912
    %v914 = vpop.f32.mrf.mxu0
    %v915 = vadd.f32 0.0, %v914
    %916 = vmatmul.bf16.gmra.mxu0 %v692
    %v917 = vpop.f32.mrf.mxu0
    %v918 = vadd.f32 0.0, %v917
    %v919 = vpop.f32.mrf.mxu0
    %v920 = vadd.f32 0.0, %v919
    %921 = vmatmul.bf16.gmra.mxu0 %v695
    %v922 = vpop.f32.mrf.mxu0
    %v923 = vadd.f32 0.0, %v922
    %v924 = vpop.f32.mrf.mxu0
    %v925 = vadd.f32 0.0, %v924
    %926 = vmatmul.bf16.gmra.mxu0 %v698
    %v927 = vpop.f32.mrf.mxu0
    %v928 = vadd.f32 0.0, %v927
    %v929 = vpop.f32.mrf.mxu0
    %v930 = vadd.f32 0.0, %v929
    %931 = vdwg.mxu0
    %v932 = vpack.c.bf16 %v142, %v142
    %v933 = vpack.c.bf16 %v144, %v144
    %v934 = vpack.c.bf16 %v147, %v147
    %v935 = vpack.c.bf16 %v149, %v149
    %v936 = vpack.c.bf16 %v152, %v152
    %v937 = vpack.c.bf16 %v154, %v154
    %v938 = vpack.c.bf16 %v157, %v157
    %v939 = vpack.c.bf16 %v159, %v159
    %v940 = vpack.c.bf16 %v183, %v183
    %v941 = vpack.c.bf16 %v185, %v185
    %v942 = vpack.c.bf16 %v188, %v188
    %v943 = vpack.c.bf16 %v190, %v190
    %v944 = vpack.c.bf16 %v193, %v193
    %v945 = vpack.c.bf16 %v195, %v195
    %v946 = vpack.c.bf16 %v198, %v198
    %v947 = vpack.c.bf16 %v200, %v200
    %v948 = vpack.c.bf16 %v224, %v224
    %v949 = vpack.c.bf16 %v226, %v226
    %v950 = vpack.c.bf16 %v229, %v229
    %v951 = vpack.c.bf16 %v231, %v231
    %v952 = vpack.c.bf16 %v234, %v234
    %v953 = vpack.c.bf16 %v236, %v236
    %v954 = vpack.c.bf16 %v239, %v239
    %v955 = vpack.c.bf16 %v241, %v241
    %v956 = vpack.c.bf16 %v265, %v265
    %v957 = vpack.c.bf16 %v267, %v267
    %v958 = vpack.c.bf16 %v270, %v270
    %v959 = vpack.c.bf16 %v272, %v272
    %v960 = vpack.c.bf16 %v275, %v275
    %v961 = vpack.c.bf16 %v277, %v277
    %v962 = vpack.c.bf16 %v280, %v280
    %v963 = vpack.c.bf16 %v282, %v282
    %v964 = vpack.c.bf16 %v386, %v386
    %v965 = vpack.c.bf16 %v388, %v388
    %v966 = vpack.c.bf16 %v391, %v391
    %v967 = vpack.c.bf16 %v393, %v393
    %v968 = vpack.c.bf16 %v396, %v396
    %v969 = vpack.c.bf16 %v398, %v398
    %v970 = vpack.c.bf16 %v401, %v401
    %v971 = vpack.c.bf16 %v403, %v403
    %v972 = vpack.c.bf16 %v406, %v406
    %v973 = vpack.c.bf16 %v408, %v408
    %v974 = vpack.c.bf16 %v411, %v411
    %v975 = vpack.c.bf16 %v413, %v413
    %v976 = vpack.c.bf16 %v416, %v416
    %v977 = vpack.c.bf16 %v418, %v418
    %v978 = vpack.c.bf16 %v421, %v421
    %v979 = vpack.c.bf16 %v423, %v423
    %v980 = vpack.c.bf16 %v447, %v447
    %v981 = vpack.c.bf16 %v449, %v449
    %v982 = vpack.c.bf16 %v452, %v452
    %v983 = vpack.c.bf16 %v454, %v454
    %v984 = vpack.c.bf16 %v457, %v457
    %v985 = vpack.c.bf16 %v459, %v459
    %v986 = vpack.c.bf16 %v462, %v462
    %v987 = vpack.c.bf16 %v464, %v464
    %v988 = vpack.c.bf16 %v467, %v467
    %v989 = vpack.c.bf16 %v469, %v469
    %v990 = vpack.c.bf16 %v472, %v472
    %v991 = vpack.c.bf16 %v474, %v474
    %v992 = vpack.c.bf16 %v477, %v477
    %v993 = vpack.c.bf16 %v479, %v479
    %v994 = vpack.c.bf16 %v482, %v482
    %v995 = vpack.c.bf16 %v484, %v484
    %v996 = vpack.c.bf16 %v508, %v508
    %v997 = vpack.c.bf16 %v510, %v510
    %v998 = vpack.c.bf16 %v513, %v513
    %v999 = vpack.c.bf16 %v515, %v515
    %v1000 = vpack.c.bf16 %v518, %v518
    %v1001 = vpack.c.bf16 %v520, %v520
    %v1002 = vpack.c.bf16 %v523, %v523
    %v1003 = vpack.c.bf16 %v525, %v525
    %v1004 = vpack.c.bf16 %v528, %v528
    %v1005 = vpack.c.bf16 %v530, %v530
    %v1006 = vpack.c.bf16 %v533, %v533
    %v1007 = vpack.c.bf16 %v535, %v535
    %v1008 = vpack.c.bf16 %v538, %v538
    %v1009 = vpack.c.bf16 %v540, %v540
    %v1010 = vpack.c.bf16 %v543, %v543
    %v1011 = vpack.c.bf16 %v545, %v545
    %v1012 = vpack.c.bf16 %v569, %v569
    %v1013 = vpack.c.bf16 %v571, %v571
    %v1014 = vpack.c.bf16 %v574, %v574
    %v1015 = vpack.c.bf16 %v576, %v576
    %v1016 = vpack.c.bf16 %v579, %v579
    %v1017 = vpack.c.bf16 %v581, %v581
    %v1018 = vpack.c.bf16 %v584, %v584
    %v1019 = vpack.c.bf16 %v586, %v586
    %v1020 = vpack.c.bf16 %v589, %v589
    %v1021 = vpack.c.bf16 %v591, %v591
    %v1022 = vpack.c.bf16 %v594, %v594
    %v1023 = vpack.c.bf16 %v596, %v596
    %v1024 = vpack.c.bf16 %v599, %v599
    %v1025 = vpack.c.bf16 %v601, %v601
    %v1026 = vpack.c.bf16 %v604, %v604
    %v1027 = vpack.c.bf16 %v606, %v606
    %v1028 = vpack.c.bf16 %v710, %v710
    %v1029 = vpack.c.bf16 %v712, %v712
    %v1030 = vpack.c.bf16 %v715, %v715
    %v1031 = vpack.c.bf16 %v717, %v717
    %v1032 = vpack.c.bf16 %v720, %v720
    %v1033 = vpack.c.bf16 %v722, %v722
    %v1034 = vpack.c.bf16 %v725, %v725
    %v1035 = vpack.c.bf16 %v727, %v727
    %v1036 = vpack.c.bf16 %v730, %v730
    %v1037 = vpack.c.bf16 %v732, %v732
    %v1038 = vpack.c.bf16 %v735, %v735
    %v1039 = vpack.c.bf16 %v737, %v737
    %v1040 = vpack.c.bf16 %v740, %v740
    %v1041 = vpack.c.bf16 %v742, %v742
    %v1042 = vpack.c.bf16 %v745, %v745
    %v1043 = vpack.c.bf16 %v747, %v747
    %v1044 = vpack.c.bf16 %v771, %v771
    %v1045 = vpack.c.bf16 %v773, %v773
    %v1046 = vpack.c.bf16 %v776, %v776
    %v1047 = vpack.c.bf16 %v778, %v778
    %v1048 = vpack.c.bf16 %v781, %v781
    %v1049 = vpack.c.bf16 %v783, %v783
    %v1050 = vpack.c.bf16 %v786, %v786
    %v1051 = vpack.c.bf16 %v788, %v788
    %v1052 = vpack.c.bf16 %v791, %v791
    %v1053 = vpack.c.bf16 %v793, %v793
    %v1054 = vpack.c.bf16 %v796, %v796
    %v1055 = vpack.c.bf16 %v798, %v798
    %v1056 = vpack.c.bf16 %v801, %v801
    %v1057 = vpack.c.bf16 %v803, %v803
    %v1058 = vpack.c.bf16 %v806, %v806
    %v1059 = vpack.c.bf16 %v808, %v808
    %v1060 = vpack.c.bf16 %v832, %v832
    %v1061 = vpack.c.bf16 %v834, %v834
    %v1062 = vpack.c.bf16 %v837, %v837
    %v1063 = vpack.c.bf16 %v839, %v839
    %v1064 = vpack.c.bf16 %v842, %v842
    %v1065 = vpack.c.bf16 %v844, %v844
    %v1066 = vpack.c.bf16 %v847, %v847
    %v1067 = vpack.c.bf16 %v849, %v849
    %v1068 = vpack.c.bf16 %v852, %v852
    %v1069 = vpack.c.bf16 %v854, %v854
    %v1070 = vpack.c.bf16 %v857, %v857
    %v1071 = vpack.c.bf16 %v859, %v859
    %v1072 = vpack.c.bf16 %v862, %v862
    %v1073 = vpack.c.bf16 %v864, %v864
    %v1074 = vpack.c.bf16 %v867, %v867
    %v1075 = vpack.c.bf16 %v869, %v869
    %v1076 = vpack.c.bf16 %v893, %v893
    %v1077 = vpack.c.bf16 %v895, %v895
    %v1078 = vpack.c.bf16 %v898, %v898
    %v1079 = vpack.c.bf16 %v900, %v900
    %v1080 = vpack.c.bf16 %v903, %v903
    %v1081 = vpack.c.bf16 %v905, %v905
    %v1082 = vpack.c.bf16 %v908, %v908
    %v1083 = vpack.c.bf16 %v910, %v910
    %v1084 = vpack.c.bf16 %v913, %v913
    %v1085 = vpack.c.bf16 %v915, %v915
    %v1086 = vpack.c.bf16 %v918, %v918
    %v1087 = vpack.c.bf16 %v920, %v920
    %v1088 = vpack.c.bf16 %v923, %v923
    %v1089 = vpack.c.bf16 %v925, %v925
    %v1090 = vpack.c.bf16 %v928, %v928
    %v1091 = vpack.c.bf16 %v930, %v930
    %v1094 = vunpack.c.l.b16 %v964
    %v1095 = vunpack.c.l.b16 %v965
    %v1096 = vpack.c.b16 %v1095, %v1094
    %vm1097 = vcmask 64512
    %v1099 = vsel %vm1097, %v932, 0
    %v1102 = vsel %vm1097, %v1096, 0
    %1104 = vmatpush.bf16.xpose.msra.mxu0 0
    %1105 = vmatpush.bf16.xpose.msra.mxu0 0
    %1106 = vmatpush.bf16.xpose.msra.mxu0 0
    %1107 = vmatpush.bf16.xpose.msra.mxu0 0
    %1108 = vmatpush.bf16.xpose.msra.mxu0 0
    %1109 = vmatpush.bf16.xpose.msra.mxu0 0
    %1110 = vmatpush.bf16.xpose.msra.mxu0 0
    %1111 = vmatpush.bf16.xpose.msra.mxu0 %v1102
    %1112 = vmatmul.bf16.gmra.mxu0 %v1099
    %v1113 = vpop.f32.mrf.mxu0
    %v1114 = vadd.f32 0.0, %v1113
    %v1115 = vpop.f32.mrf.mxu0
    %1116 = vdwg.mxu0
    %v1119 = vunpack.c.l.b16 %v966
    %v1120 = vunpack.c.l.b16 %v967
    %v1121 = vpack.c.b16 %v1120, %v1119
    %v1123 = vsel %vm1097, %v933, 0
    %v1126 = vsel %vm1097, %v1121, 0
    %1128 = vmatpush.bf16.xpose.msra.mxu0 0
    %1129 = vmatpush.bf16.xpose.msra.mxu0 0
    %1130 = vmatpush.bf16.xpose.msra.mxu0 0
    %1131 = vmatpush.bf16.xpose.msra.mxu0 0
    %1132 = vmatpush.bf16.xpose.msra.mxu0 0
    %1133 = vmatpush.bf16.xpose.msra.mxu0 0
    %1134 = vmatpush.bf16.xpose.msra.mxu0 0
    %1135 = vmatpush.bf16.xpose.msra.mxu0 %v1126
    %1136 = vmatmul.bf16.gmra.mxu0 %v1123
    %v1137 = vpop.f32.mrf.mxu0
    %v1138 = vadd.f32 0.0, %v1137
    %v1139 = vpop.f32.mrf.mxu0
    %1140 = vdwg.mxu0
    %v1143 = vunpack.c.l.b16 %v968
    %v1144 = vunpack.c.l.b16 %v969
    %v1145 = vpack.c.b16 %v1144, %v1143
    %v1147 = vsel %vm1097, %v934, 0
    %v1150 = vsel %vm1097, %v1145, 0
    %1152 = vmatpush.bf16.xpose.msra.mxu0 0
    %1153 = vmatpush.bf16.xpose.msra.mxu0 0
    %1154 = vmatpush.bf16.xpose.msra.mxu0 0
    %1155 = vmatpush.bf16.xpose.msra.mxu0 0
    %1156 = vmatpush.bf16.xpose.msra.mxu0 0
    %1157 = vmatpush.bf16.xpose.msra.mxu0 0
    %1158 = vmatpush.bf16.xpose.msra.mxu0 0
    %1159 = vmatpush.bf16.xpose.msra.mxu0 %v1150
    %1160 = vmatmul.bf16.gmra.mxu0 %v1147
    %v1161 = vpop.f32.mrf.mxu0
    %v1162 = vadd.f32 0.0, %v1161
    %v1163 = vpop.f32.mrf.mxu0
    %1164 = vdwg.mxu0
    %v1167 = vunpack.c.l.b16 %v970
    %v1168 = vunpack.c.l.b16 %v971
    %v1169 = vpack.c.b16 %v1168, %v1167
    %v1171 = vsel %vm1097, %v935, 0
    %v1174 = vsel %vm1097, %v1169, 0
    %1176 = vmatpush.bf16.xpose.msra.mxu0 0
    %1177 = vmatpush.bf16.xpose.msra.mxu0 0
    %1178 = vmatpush.bf16.xpose.msra.mxu0 0
    %1179 = vmatpush.bf16.xpose.msra.mxu0 0
    %1180 = vmatpush.bf16.xpose.msra.mxu0 0
    %1181 = vmatpush.bf16.xpose.msra.mxu0 0
    %1182 = vmatpush.bf16.xpose.msra.mxu0 0
    %1183 = vmatpush.bf16.xpose.msra.mxu0 %v1174
    %1184 = vmatmul.bf16.gmra.mxu0 %v1171
    %v1185 = vpop.f32.mrf.mxu0
    %v1186 = vadd.f32 0.0, %v1185
    %v1187 = vpop.f32.mrf.mxu0
    %1188 = vdwg.mxu0
    %v1191 = vunpack.c.l.b16 %v972
    %v1192 = vunpack.c.l.b16 %v973
    %v1193 = vpack.c.b16 %v1192, %v1191
    %v1195 = vsel %vm1097, %v936, 0
    %v1198 = vsel %vm1097, %v1193, 0
    %1200 = vmatpush.bf16.xpose.msra.mxu0 0
    %1201 = vmatpush.bf16.xpose.msra.mxu0 0
    %1202 = vmatpush.bf16.xpose.msra.mxu0 0
    %1203 = vmatpush.bf16.xpose.msra.mxu0 0
    %1204 = vmatpush.bf16.xpose.msra.mxu0 0
    %1205 = vmatpush.bf16.xpose.msra.mxu0 0
    %1206 = vmatpush.bf16.xpose.msra.mxu0 0
    %1207 = vmatpush.bf16.xpose.msra.mxu0 %v1198
    %1208 = vmatmul.bf16.gmra.mxu0 %v1195
    %v1209 = vpop.f32.mrf.mxu0
    %v1210 = vadd.f32 0.0, %v1209
    %v1211 = vpop.f32.mrf.mxu0
    %1212 = vdwg.mxu0
    %v1215 = vunpack.c.l.b16 %v974
    %v1216 = vunpack.c.l.b16 %v975
    %v1217 = vpack.c.b16 %v1216, %v1215
    %v1219 = vsel %vm1097, %v937, 0
    %v1222 = vsel %vm1097, %v1217, 0
    %1224 = vmatpush.bf16.xpose.msra.mxu0 0
    %1225 = vmatpush.bf16.xpose.msra.mxu0 0
    %1226 = vmatpush.bf16.xpose.msra.mxu0 0
    %1227 = vmatpush.bf16.xpose.msra.mxu0 0
    %1228 = vmatpush.bf16.xpose.msra.mxu0 0
    %1229 = vmatpush.bf16.xpose.msra.mxu0 0
    %1230 = vmatpush.bf16.xpose.msra.mxu0 0
    %1231 = vmatpush.bf16.xpose.msra.mxu0 %v1222
    %1232 = vmatmul.bf16.gmra.mxu0 %v1219
    %v1233 = vpop.f32.mrf.mxu0
    %v1234 = vadd.f32 0.0, %v1233
    %v1235 = vpop.f32.mrf.mxu0
    %1236 = vdwg.mxu0
    %v1239 = vunpack.c.l.b16 %v976
    %v1240 = vunpack.c.l.b16 %v977
    %v1241 = vpack.c.b16 %v1240, %v1239
    %v1243 = vsel %vm1097, %v938, 0
    %v1246 = vsel %vm1097, %v1241, 0
    %1248 = vmatpush.bf16.xpose.msra.mxu0 0
    %1249 = vmatpush.bf16.xpose.msra.mxu0 0
    %1250 = vmatpush.bf16.xpose.msra.mxu0 0
    %1251 = vmatpush.bf16.xpose.msra.mxu0 0
    %1252 = vmatpush.bf16.xpose.msra.mxu0 0
    %1253 = vmatpush.bf16.xpose.msra.mxu0 0
    %1254 = vmatpush.bf16.xpose.msra.mxu0 0
    %1255 = vmatpush.bf16.xpose.msra.mxu0 %v1246
    %1256 = vmatmul.bf16.gmra.mxu0 %v1243
    %v1257 = vpop.f32.mrf.mxu0
    %v1258 = vadd.f32 0.0, %v1257
    %v1259 = vpop.f32.mrf.mxu0
    %1260 = vdwg.mxu0
    %v1263 = vunpack.c.l.b16 %v978
    %v1264 = vunpack.c.l.b16 %v979
    %v1265 = vpack.c.b16 %v1264, %v1263
    %v1267 = vsel %vm1097, %v939, 0
    %v1270 = vsel %vm1097, %v1265, 0
    %1272 = vmatpush.bf16.xpose.msra.mxu0 0
    %1273 = vmatpush.bf16.xpose.msra.mxu0 0
    %1274 = vmatpush.bf16.xpose.msra.mxu0 0
    %1275 = vmatpush.bf16.xpose.msra.mxu0 0
    %1276 = vmatpush.bf16.xpose.msra.mxu0 0
    %1277 = vmatpush.bf16.xpose.msra.mxu0 0
    %1278 = vmatpush.bf16.xpose.msra.mxu0 0
    %1279 = vmatpush.bf16.xpose.msra.mxu0 %v1270
    %1280 = vmatmul.bf16.gmra.mxu0 %v1267
    %v1281 = vpop.f32.mrf.mxu0
    %v1282 = vadd.f32 0.0, %v1281
    %v1283 = vpop.f32.mrf.mxu0
    %1284 = vdwg.mxu0
    %v1287 = vunpack.c.l.b16 %v980
    %v1288 = vunpack.c.l.b16 %v981
    %v1289 = vpack.c.b16 %v1288, %v1287
    %v1291 = vsel %vm1097, %v940, 0
    %v1294 = vsel %vm1097, %v1289, 0
    %1296 = vmatpush.bf16.xpose.msra.mxu0 0
    %1297 = vmatpush.bf16.xpose.msra.mxu0 0
    %1298 = vmatpush.bf16.xpose.msra.mxu0 0
    %1299 = vmatpush.bf16.xpose.msra.mxu0 0
    %1300 = vmatpush.bf16.xpose.msra.mxu0 0
    %1301 = vmatpush.bf16.xpose.msra.mxu0 0
    %1302 = vmatpush.bf16.xpose.msra.mxu0 0
    %1303 = vmatpush.bf16.xpose.msra.mxu0 %v1294
    %1304 = vmatmul.bf16.gmra.mxu0 %v1291
    %v1305 = vpop.f32.mrf.mxu0
    %v1306 = vadd.f32 0.0, %v1305
    %v1307 = vpop.f32.mrf.mxu0
    %1308 = vdwg.mxu0
    %v1311 = vunpack.c.l.b16 %v982
    %v1312 = vunpack.c.l.b16 %v983
    %v1313 = vpack.c.b16 %v1312, %v1311
    %v1315 = vsel %vm1097, %v941, 0
    %v1318 = vsel %vm1097, %v1313, 0
    %1320 = vmatpush.bf16.xpose.msra.mxu0 0
    %1321 = vmatpush.bf16.xpose.msra.mxu0 0
    %1322 = vmatpush.bf16.xpose.msra.mxu0 0
    %1323 = vmatpush.bf16.xpose.msra.mxu0 0
    %1324 = vmatpush.bf16.xpose.msra.mxu0 0
    %1325 = vmatpush.bf16.xpose.msra.mxu0 0
    %1326 = vmatpush.bf16.xpose.msra.mxu0 0
    %1327 = vmatpush.bf16.xpose.msra.mxu0 %v1318
    %1328 = vmatmul.bf16.gmra.mxu0 %v1315
    %v1329 = vpop.f32.mrf.mxu0
    %v1330 = vadd.f32 0.0, %v1329
    %v1331 = vpop.f32.mrf.mxu0
    %1332 = vdwg.mxu0
    %v1335 = vunpack.c.l.b16 %v984
    %v1336 = vunpack.c.l.b16 %v985
    %v1337 = vpack.c.b16 %v1336, %v1335
    %v1339 = vsel %vm1097, %v942, 0
    %v1342 = vsel %vm1097, %v1337, 0
    %1344 = vmatpush.bf16.xpose.msra.mxu0 0
    %1345 = vmatpush.bf16.xpose.msra.mxu0 0
    %1346 = vmatpush.bf16.xpose.msra.mxu0 0
    %1347 = vmatpush.bf16.xpose.msra.mxu0 0
    %1348 = vmatpush.bf16.xpose.msra.mxu0 0
    %1349 = vmatpush.bf16.xpose.msra.mxu0 0
    %1350 = vmatpush.bf16.xpose.msra.mxu0 0
    %1351 = vmatpush.bf16.xpose.msra.mxu0 %v1342
    %1352 = vmatmul.bf16.gmra.mxu0 %v1339
    %v1353 = vpop.f32.mrf.mxu0
    %v1354 = vadd.f32 0.0, %v1353
    %v1355 = vpop.f32.mrf.mxu0
    %1356 = vdwg.mxu0
    %v1359 = vunpack.c.l.b16 %v986
    %v1360 = vunpack.c.l.b16 %v987
    %v1361 = vpack.c.b16 %v1360, %v1359
    %v1363 = vsel %vm1097, %v943, 0
    %v1366 = vsel %vm1097, %v1361, 0
    %1368 = vmatpush.bf16.xpose.msra.mxu0 0
    %1369 = vmatpush.bf16.xpose.msra.mxu0 0
    %1370 = vmatpush.bf16.xpose.msra.mxu0 0
    %1371 = vmatpush.bf16.xpose.msra.mxu0 0
    %1372 = vmatpush.bf16.xpose.msra.mxu0 0
    %1373 = vmatpush.bf16.xpose.msra.mxu0 0
    %1374 = vmatpush.bf16.xpose.msra.mxu0 0
    %1375 = vmatpush.bf16.xpose.msra.mxu0 %v1366
    %1376 = vmatmul.bf16.gmra.mxu0 %v1363
    %v1377 = vpop.f32.mrf.mxu0
    %v1378 = vadd.f32 0.0, %v1377
    %v1379 = vpop.f32.mrf.mxu0
    %1380 = vdwg.mxu0
    %v1383 = vunpack.c.l.b16 %v988
    %v1384 = vunpack.c.l.b16 %v989
    %v1385 = vpack.c.b16 %v1384, %v1383
    %v1387 = vsel %vm1097, %v944, 0
    %v1390 = vsel %vm1097, %v1385, 0
    %1392 = vmatpush.bf16.xpose.msra.mxu0 0
    %1393 = vmatpush.bf16.xpose.msra.mxu0 0
    %1394 = vmatpush.bf16.xpose.msra.mxu0 0
    %1395 = vmatpush.bf16.xpose.msra.mxu0 0
    %1396 = vmatpush.bf16.xpose.msra.mxu0 0
    %1397 = vmatpush.bf16.xpose.msra.mxu0 0
    %1398 = vmatpush.bf16.xpose.msra.mxu0 0
    %1399 = vmatpush.bf16.xpose.msra.mxu0 %v1390
    %1400 = vmatmul.bf16.gmra.mxu0 %v1387
    %v1401 = vpop.f32.mrf.mxu0
    %v1402 = vadd.f32 0.0, %v1401
    %v1403 = vpop.f32.mrf.mxu0
    %1404 = vdwg.mxu0
    %v1407 = vunpack.c.l.b16 %v990
    %v1408 = vunpack.c.l.b16 %v991
    %v1409 = vpack.c.b16 %v1408, %v1407
    %v1411 = vsel %vm1097, %v945, 0
    %v1414 = vsel %vm1097, %v1409, 0
    %1416 = vmatpush.bf16.xpose.msra.mxu0 0
    %1417 = vmatpush.bf16.xpose.msra.mxu0 0
    %1418 = vmatpush.bf16.xpose.msra.mxu0 0
    %1419 = vmatpush.bf16.xpose.msra.mxu0 0
    %1420 = vmatpush.bf16.xpose.msra.mxu0 0
    %1421 = vmatpush.bf16.xpose.msra.mxu0 0
    %1422 = vmatpush.bf16.xpose.msra.mxu0 0
    %1423 = vmatpush.bf16.xpose.msra.mxu0 %v1414
    %1424 = vmatmul.bf16.gmra.mxu0 %v1411
    %v1425 = vpop.f32.mrf.mxu0
    %v1426 = vadd.f32 0.0, %v1425
    %v1427 = vpop.f32.mrf.mxu0
    %1428 = vdwg.mxu0
    %v1431 = vunpack.c.l.b16 %v992
    %v1432 = vunpack.c.l.b16 %v993
    %v1433 = vpack.c.b16 %v1432, %v1431
    %v1435 = vsel %vm1097, %v946, 0
    %v1438 = vsel %vm1097, %v1433, 0
    %1440 = vmatpush.bf16.xpose.msra.mxu0 0
    %1441 = vmatpush.bf16.xpose.msra.mxu0 0
    %1442 = vmatpush.bf16.xpose.msra.mxu0 0
    %1443 = vmatpush.bf16.xpose.msra.mxu0 0
    %1444 = vmatpush.bf16.xpose.msra.mxu0 0
    %1445 = vmatpush.bf16.xpose.msra.mxu0 0
    %1446 = vmatpush.bf16.xpose.msra.mxu0 0
    %1447 = vmatpush.bf16.xpose.msra.mxu0 %v1438
    %1448 = vmatmul.bf16.gmra.mxu0 %v1435
    %v1449 = vpop.f32.mrf.mxu0
    %v1450 = vadd.f32 0.0, %v1449
    %v1451 = vpop.f32.mrf.mxu0
    %1452 = vdwg.mxu0
    %v1455 = vunpack.c.l.b16 %v994
    %v1456 = vunpack.c.l.b16 %v995
    %v1457 = vpack.c.b16 %v1456, %v1455
    %v1459 = vsel %vm1097, %v947, 0
    %v1462 = vsel %vm1097, %v1457, 0
    %1464 = vmatpush.bf16.xpose.msra.mxu0 0
    %1465 = vmatpush.bf16.xpose.msra.mxu0 0
    %1466 = vmatpush.bf16.xpose.msra.mxu0 0
    %1467 = vmatpush.bf16.xpose.msra.mxu0 0
    %1468 = vmatpush.bf16.xpose.msra.mxu0 0
    %1469 = vmatpush.bf16.xpose.msra.mxu0 0
    %1470 = vmatpush.bf16.xpose.msra.mxu0 0
    %1471 = vmatpush.bf16.xpose.msra.mxu0 %v1462
    %1472 = vmatmul.bf16.gmra.mxu0 %v1459
    %v1473 = vpop.f32.mrf.mxu0
    %v1474 = vadd.f32 0.0, %v1473
    %v1475 = vpop.f32.mrf.mxu0
    %1476 = vdwg.mxu0
    %v1479 = vunpack.c.l.b16 %v996
    %v1480 = vunpack.c.l.b16 %v997
    %v1481 = vpack.c.b16 %v1480, %v1479
    %v1483 = vsel %vm1097, %v948, 0
    %v1486 = vsel %vm1097, %v1481, 0
    %1488 = vmatpush.bf16.xpose.msra.mxu0 0
    %1489 = vmatpush.bf16.xpose.msra.mxu0 0
    %1490 = vmatpush.bf16.xpose.msra.mxu0 0
    %1491 = vmatpush.bf16.xpose.msra.mxu0 0
    %1492 = vmatpush.bf16.xpose.msra.mxu0 0
    %1493 = vmatpush.bf16.xpose.msra.mxu0 0
    %1494 = vmatpush.bf16.xpose.msra.mxu0 0
    %1495 = vmatpush.bf16.xpose.msra.mxu0 %v1486
    %1496 = vmatmul.bf16.gmra.mxu0 %v1483
    %v1497 = vpop.f32.mrf.mxu0
    %v1498 = vadd.f32 0.0, %v1497
    %v1499 = vpop.f32.mrf.mxu0
    %1500 = vdwg.mxu0
    %v1503 = vunpack.c.l.b16 %v998
    %v1504 = vunpack.c.l.b16 %v999
    %v1505 = vpack.c.b16 %v1504, %v1503
    %v1507 = vsel %vm1097, %v949, 0
    %v1510 = vsel %vm1097, %v1505, 0
    %1512 = vmatpush.bf16.xpose.msra.mxu0 0
    %1513 = vmatpush.bf16.xpose.msra.mxu0 0
    %1514 = vmatpush.bf16.xpose.msra.mxu0 0
    %1515 = vmatpush.bf16.xpose.msra.mxu0 0
    %1516 = vmatpush.bf16.xpose.msra.mxu0 0
    %1517 = vmatpush.bf16.xpose.msra.mxu0 0
    %1518 = vmatpush.bf16.xpose.msra.mxu0 0
    %1519 = vmatpush.bf16.xpose.msra.mxu0 %v1510
    %1520 = vmatmul.bf16.gmra.mxu0 %v1507
    %v1521 = vpop.f32.mrf.mxu0
    %v1522 = vadd.f32 0.0, %v1521
    %v1523 = vpop.f32.mrf.mxu0
    %1524 = vdwg.mxu0
    %v1527 = vunpack.c.l.b16 %v1000
    %v1528 = vunpack.c.l.b16 %v1001
    %v1529 = vpack.c.b16 %v1528, %v1527
    %v1531 = vsel %vm1097, %v950, 0
    %v1534 = vsel %vm1097, %v1529, 0
    %1536 = vmatpush.bf16.xpose.msra.mxu0 0
    %1537 = vmatpush.bf16.xpose.msra.mxu0 0
    %1538 = vmatpush.bf16.xpose.msra.mxu0 0
    %1539 = vmatpush.bf16.xpose.msra.mxu0 0
    %1540 = vmatpush.bf16.xpose.msra.mxu0 0
    %1541 = vmatpush.bf16.xpose.msra.mxu0 0
    %1542 = vmatpush.bf16.xpose.msra.mxu0 0
    %1543 = vmatpush.bf16.xpose.msra.mxu0 %v1534
    %1544 = vmatmul.bf16.gmra.mxu0 %v1531
    %v1545 = vpop.f32.mrf.mxu0
    %v1546 = vadd.f32 0.0, %v1545
    %v1547 = vpop.f32.mrf.mxu0
    %1548 = vdwg.mxu0
    %v1551 = vunpack.c.l.b16 %v1002
    %v1552 = vunpack.c.l.b16 %v1003
    %v1553 = vpack.c.b16 %v1552, %v1551
    %v1555 = vsel %vm1097, %v951, 0
    %v1558 = vsel %vm1097, %v1553, 0
    %1560 = vmatpush.bf16.xpose.msra.mxu0 0
    %1561 = vmatpush.bf16.xpose.msra.mxu0 0
    %1562 = vmatpush.bf16.xpose.msra.mxu0 0
    %1563 = vmatpush.bf16.xpose.msra.mxu0 0
    %1564 = vmatpush.bf16.xpose.msra.mxu0 0
    %1565 = vmatpush.bf16.xpose.msra.mxu0 0
    %1566 = vmatpush.bf16.xpose.msra.mxu0 0
    %1567 = vmatpush.bf16.xpose.msra.mxu0 %v1558
    %1568 = vmatmul.bf16.gmra.mxu0 %v1555
    %v1569 = vpop.f32.mrf.mxu0
    %v1570 = vadd.f32 0.0, %v1569
    %v1571 = vpop.f32.mrf.mxu0
    %1572 = vdwg.mxu0
    %v1575 = vunpack.c.l.b16 %v1004
    %v1576 = vunpack.c.l.b16 %v1005
    %v1577 = vpack.c.b16 %v1576, %v1575
    %v1579 = vsel %vm1097, %v952, 0
    %v1582 = vsel %vm1097, %v1577, 0
    %1584 = vmatpush.bf16.xpose.msra.mxu0 0
    %1585 = vmatpush.bf16.xpose.msra.mxu0 0
    %1586 = vmatpush.bf16.xpose.msra.mxu0 0
    %1587 = vmatpush.bf16.xpose.msra.mxu0 0
    %1588 = vmatpush.bf16.xpose.msra.mxu0 0
    %1589 = vmatpush.bf16.xpose.msra.mxu0 0
    %1590 = vmatpush.bf16.xpose.msra.mxu0 0
    %1591 = vmatpush.bf16.xpose.msra.mxu0 %v1582
    %1592 = vmatmul.bf16.gmra.mxu0 %v1579
    %v1593 = vpop.f32.mrf.mxu0
    %v1594 = vadd.f32 0.0, %v1593
    %v1595 = vpop.f32.mrf.mxu0
    %1596 = vdwg.mxu0
    %v1599 = vunpack.c.l.b16 %v1006
    %v1600 = vunpack.c.l.b16 %v1007
    %v1601 = vpack.c.b16 %v1600, %v1599
    %v1603 = vsel %vm1097, %v953, 0
    %v1606 = vsel %vm1097, %v1601, 0
    %1608 = vmatpush.bf16.xpose.msra.mxu0 0
    %1609 = vmatpush.bf16.xpose.msra.mxu0 0
    %1610 = vmatpush.bf16.xpose.msra.mxu0 0
    %1611 = vmatpush.bf16.xpose.msra.mxu0 0
    %1612 = vmatpush.bf16.xpose.msra.mxu0 0
    %1613 = vmatpush.bf16.xpose.msra.mxu0 0
    %1614 = vmatpush.bf16.xpose.msra.mxu0 0
    %1615 = vmatpush.bf16.xpose.msra.mxu0 %v1606
    %1616 = vmatmul.bf16.gmra.mxu0 %v1603
    %v1617 = vpop.f32.mrf.mxu0
    %v1618 = vadd.f32 0.0, %v1617
    %v1619 = vpop.f32.mrf.mxu0
    %1620 = vdwg.mxu0
    %v1623 = vunpack.c.l.b16 %v1008
    %v1624 = vunpack.c.l.b16 %v1009
    %v1625 = vpack.c.b16 %v1624, %v1623
    %v1627 = vsel %vm1097, %v954, 0
    %v1630 = vsel %vm1097, %v1625, 0
    %1632 = vmatpush.bf16.xpose.msra.mxu0 0
    %1633 = vmatpush.bf16.xpose.msra.mxu0 0
    %1634 = vmatpush.bf16.xpose.msra.mxu0 0
    %1635 = vmatpush.bf16.xpose.msra.mxu0 0
    %1636 = vmatpush.bf16.xpose.msra.mxu0 0
    %1637 = vmatpush.bf16.xpose.msra.mxu0 0
    %1638 = vmatpush.bf16.xpose.msra.mxu0 0
    %1639 = vmatpush.bf16.xpose.msra.mxu0 %v1630
    %1640 = vmatmul.bf16.gmra.mxu0 %v1627
    %v1641 = vpop.f32.mrf.mxu0
    %v1642 = vadd.f32 0.0, %v1641
    %v1643 = vpop.f32.mrf.mxu0
    %1644 = vdwg.mxu0
    %v1647 = vunpack.c.l.b16 %v1010
    %v1648 = vunpack.c.l.b16 %v1011
    %v1649 = vpack.c.b16 %v1648, %v1647
    %v1651 = vsel %vm1097, %v955, 0
    %v1654 = vsel %vm1097, %v1649, 0
    %1656 = vmatpush.bf16.xpose.msra.mxu0 0
    %1657 = vmatpush.bf16.xpose.msra.mxu0 0
    %1658 = vmatpush.bf16.xpose.msra.mxu0 0
    %1659 = vmatpush.bf16.xpose.msra.mxu0 0
    %1660 = vmatpush.bf16.xpose.msra.mxu0 0
    %1661 = vmatpush.bf16.xpose.msra.mxu0 0
    %1662 = vmatpush.bf16.xpose.msra.mxu0 0
    %1663 = vmatpush.bf16.xpose.msra.mxu0 %v1654
    %1664 = vmatmul.bf16.gmra.mxu0 %v1651
    %v1665 = vpop.f32.mrf.mxu0
    %v1666 = vadd.f32 0.0, %v1665
    %v1667 = vpop.f32.mrf.mxu0
    %1668 = vdwg.mxu0
    %v1671 = vunpack.c.l.b16 %v1012
    %v1672 = vunpack.c.l.b16 %v1013
    %v1673 = vpack.c.b16 %v1672, %v1671
    %v1675 = vsel %vm1097, %v956, 0
    %v1678 = vsel %vm1097, %v1673, 0
    %1680 = vmatpush.bf16.xpose.msra.mxu0 0
    %1681 = vmatpush.bf16.xpose.msra.mxu0 0
    %1682 = vmatpush.bf16.xpose.msra.mxu0 0
    %1683 = vmatpush.bf16.xpose.msra.mxu0 0
    %1684 = vmatpush.bf16.xpose.msra.mxu0 0
    %1685 = vmatpush.bf16.xpose.msra.mxu0 0
    %1686 = vmatpush.bf16.xpose.msra.mxu0 0
    %1687 = vmatpush.bf16.xpose.msra.mxu0 %v1678
    %1688 = vmatmul.bf16.gmra.mxu0 %v1675
    %v1689 = vpop.f32.mrf.mxu0
    %v1690 = vadd.f32 0.0, %v1689
    %v1691 = vpop.f32.mrf.mxu0
    %1692 = vdwg.mxu0
    %v1695 = vunpack.c.l.b16 %v1014
    %v1696 = vunpack.c.l.b16 %v1015
    %v1697 = vpack.c.b16 %v1696, %v1695
    %v1699 = vsel %vm1097, %v957, 0
    %v1702 = vsel %vm1097, %v1697, 0
    %1704 = vmatpush.bf16.xpose.msra.mxu0 0
    %1705 = vmatpush.bf16.xpose.msra.mxu0 0
    %1706 = vmatpush.bf16.xpose.msra.mxu0 0
    %1707 = vmatpush.bf16.xpose.msra.mxu0 0
    %1708 = vmatpush.bf16.xpose.msra.mxu0 0
    %1709 = vmatpush.bf16.xpose.msra.mxu0 0
    %1710 = vmatpush.bf16.xpose.msra.mxu0 0
    %1711 = vmatpush.bf16.xpose.msra.mxu0 %v1702
    %1712 = vmatmul.bf16.gmra.mxu0 %v1699
    %v1713 = vpop.f32.mrf.mxu0
    %v1714 = vadd.f32 0.0, %v1713
    %v1715 = vpop.f32.mrf.mxu0
    %1716 = vdwg.mxu0
    %v1719 = vunpack.c.l.b16 %v1016
    %v1720 = vunpack.c.l.b16 %v1017
    %v1721 = vpack.c.b16 %v1720, %v1719
    %v1723 = vsel %vm1097, %v958, 0
    %v1726 = vsel %vm1097, %v1721, 0
    %1728 = vmatpush.bf16.xpose.msra.mxu0 0
    %1729 = vmatpush.bf16.xpose.msra.mxu0 0
    %1730 = vmatpush.bf16.xpose.msra.mxu0 0
    %1731 = vmatpush.bf16.xpose.msra.mxu0 0
    %1732 = vmatpush.bf16.xpose.msra.mxu0 0
    %1733 = vmatpush.bf16.xpose.msra.mxu0 0
    %1734 = vmatpush.bf16.xpose.msra.mxu0 0
    %1735 = vmatpush.bf16.xpose.msra.mxu0 %v1726
    %1736 = vmatmul.bf16.gmra.mxu0 %v1723
    %v1737 = vpop.f32.mrf.mxu0
    %v1738 = vadd.f32 0.0, %v1737
    %v1739 = vpop.f32.mrf.mxu0
    %1740 = vdwg.mxu0
    %v1743 = vunpack.c.l.b16 %v1018
    %v1744 = vunpack.c.l.b16 %v1019
    %v1745 = vpack.c.b16 %v1744, %v1743
    %v1747 = vsel %vm1097, %v959, 0
    %v1750 = vsel %vm1097, %v1745, 0
    %1752 = vmatpush.bf16.xpose.msra.mxu0 0
    %1753 = vmatpush.bf16.xpose.msra.mxu0 0
    %1754 = vmatpush.bf16.xpose.msra.mxu0 0
    %1755 = vmatpush.bf16.xpose.msra.mxu0 0
    %1756 = vmatpush.bf16.xpose.msra.mxu0 0
    %1757 = vmatpush.bf16.xpose.msra.mxu0 0
    %1758 = vmatpush.bf16.xpose.msra.mxu0 0
    %1759 = vmatpush.bf16.xpose.msra.mxu0 %v1750
    %1760 = vmatmul.bf16.gmra.mxu0 %v1747
    %v1761 = vpop.f32.mrf.mxu0
    %v1762 = vadd.f32 0.0, %v1761
    %v1763 = vpop.f32.mrf.mxu0
    %1764 = vdwg.mxu0
    %v1767 = vunpack.c.l.b16 %v1020
    %v1768 = vunpack.c.l.b16 %v1021
    %v1769 = vpack.c.b16 %v1768, %v1767
    %v1771 = vsel %vm1097, %v960, 0
    %v1774 = vsel %vm1097, %v1769, 0
    %1776 = vmatpush.bf16.xpose.msra.mxu0 0
    %1777 = vmatpush.bf16.xpose.msra.mxu0 0
    %1778 = vmatpush.bf16.xpose.msra.mxu0 0
    %1779 = vmatpush.bf16.xpose.msra.mxu0 0
    %1780 = vmatpush.bf16.xpose.msra.mxu0 0
    %1781 = vmatpush.bf16.xpose.msra.mxu0 0
    %1782 = vmatpush.bf16.xpose.msra.mxu0 0
    %1783 = vmatpush.bf16.xpose.msra.mxu0 %v1774
    %1784 = vmatmul.bf16.gmra.mxu0 %v1771
    %v1785 = vpop.f32.mrf.mxu0
    %v1786 = vadd.f32 0.0, %v1785
    %v1787 = vpop.f32.mrf.mxu0
    %1788 = vdwg.mxu0
    %v1791 = vunpack.c.l.b16 %v1022
    %v1792 = vunpack.c.l.b16 %v1023
    %v1793 = vpack.c.b16 %v1792, %v1791
    %v1795 = vsel %vm1097, %v961, 0
    %v1798 = vsel %vm1097, %v1793, 0
    %1800 = vmatpush.bf16.xpose.msra.mxu0 0
    %1801 = vmatpush.bf16.xpose.msra.mxu0 0
    %1802 = vmatpush.bf16.xpose.msra.mxu0 0
    %1803 = vmatpush.bf16.xpose.msra.mxu0 0
    %1804 = vmatpush.bf16.xpose.msra.mxu0 0
    %1805 = vmatpush.bf16.xpose.msra.mxu0 0
    %1806 = vmatpush.bf16.xpose.msra.mxu0 0
    %1807 = vmatpush.bf16.xpose.msra.mxu0 %v1798
    %1808 = vmatmul.bf16.gmra.mxu0 %v1795
    %v1809 = vpop.f32.mrf.mxu0
    %v1810 = vadd.f32 0.0, %v1809
    %v1811 = vpop.f32.mrf.mxu0
    %1812 = vdwg.mxu0
    %v1815 = vunpack.c.l.b16 %v1024
    %v1816 = vunpack.c.l.b16 %v1025
    %v1817 = vpack.c.b16 %v1816, %v1815
    %v1819 = vsel %vm1097, %v962, 0
    %v1822 = vsel %vm1097, %v1817, 0
    %1824 = vmatpush.bf16.xpose.msra.mxu0 0
    %1825 = vmatpush.bf16.xpose.msra.mxu0 0
    %1826 = vmatpush.bf16.xpose.msra.mxu0 0
    %1827 = vmatpush.bf16.xpose.msra.mxu0 0
    %1828 = vmatpush.bf16.xpose.msra.mxu0 0
    %1829 = vmatpush.bf16.xpose.msra.mxu0 0
    %1830 = vmatpush.bf16.xpose.msra.mxu0 0
    %1831 = vmatpush.bf16.xpose.msra.mxu0 %v1822
    %1832 = vmatmul.bf16.gmra.mxu0 %v1819
    %v1833 = vpop.f32.mrf.mxu0
    %v1834 = vadd.f32 0.0, %v1833
    %v1835 = vpop.f32.mrf.mxu0
    %1836 = vdwg.mxu0
    %v1839 = vunpack.c.l.b16 %v1026
    %v1840 = vunpack.c.l.b16 %v1027
    %v1841 = vpack.c.b16 %v1840, %v1839
    %v1843 = vsel %vm1097, %v963, 0
    %v1846 = vsel %vm1097, %v1841, 0
    %1848 = vmatpush.bf16.xpose.msra.mxu0 0
    %1849 = vmatpush.bf16.xpose.msra.mxu0 0
    %1850 = vmatpush.bf16.xpose.msra.mxu0 0
    %1851 = vmatpush.bf16.xpose.msra.mxu0 0
    %1852 = vmatpush.bf16.xpose.msra.mxu0 0
    %1853 = vmatpush.bf16.xpose.msra.mxu0 0
    %1854 = vmatpush.bf16.xpose.msra.mxu0 0
    %1855 = vmatpush.bf16.xpose.msra.mxu0 %v1846
    %1856 = vmatmul.bf16.gmra.mxu0 %v1843
    %v1857 = vpop.f32.mrf.mxu0
    %v1858 = vadd.f32 0.0, %v1857
    %v1859 = vpop.f32.mrf.mxu0
    %1860 = vdwg.mxu0
    %vm1861 = vcmask 130048
    %v1862 = vsel %vm1861, %v1114, -inf
    %1863 = vmax.xlane.f32.xlu0 %v1862
    %v1864 = vpop.xlane.xlu0 %1863
    %v1865 = vsel %vm1861, %v1138, -inf
    %1866 = vmax.xlane.f32.xlu0 %v1865
    %v1867 = vpop.xlane.xlu0 %1866
    %v1868 = vsel %vm1861, %v1162, -inf
    %1869 = vmax.xlane.f32.xlu0 %v1868
    %v1870 = vpop.xlane.xlu0 %1869
    %v1871 = vsel %vm1861, %v1186, -inf
    %1872 = vmax.xlane.f32.xlu0 %v1871
    %v1873 = vpop.xlane.xlu0 %1872
    %v1874 = vsel %vm1861, %v1210, -inf
    %1875 = vmax.xlane.f32.xlu0 %v1874
    %v1876 = vpop.xlane.xlu0 %1875
    %v1877 = vsel %vm1861, %v1234, -inf
    %1878 = vmax.xlane.f32.xlu0 %v1877
    %v1879 = vpop.xlane.xlu0 %1878
    %v1880 = vsel %vm1861, %v1258, -inf
    %1881 = vmax.xlane.f32.xlu0 %v1880
    %v1882 = vpop.xlane.xlu0 %1881
    %v1883 = vsel %vm1861, %v1282, -inf
    %1884 = vmax.xlane.f32.xlu0 %v1883
    %v1885 = vpop.xlane.xlu0 %1884
    %v1886 = vsel %vm1861, %v1306, -inf
    %1887 = vmax.xlane.f32.xlu0 %v1886
    %v1888 = vpop.xlane.xlu0 %1887
    %v1889 = vsel %vm1861, %v1330, -inf
    %1890 = vmax.xlane.f32.xlu0 %v1889
    %v1891 = vpop.xlane.xlu0 %1890
    %v1892 = vsel %vm1861, %v1354, -inf
    %1893 = vmax.xlane.f32.xlu0 %v1892
    %v1894 = vpop.xlane.xlu0 %1893
    %v1895 = vsel %vm1861, %v1378, -inf
    %1896 = vmax.xlane.f32.xlu0 %v1895
    %v1897 = vpop.xlane.xlu0 %1896
    %v1898 = vsel %vm1861, %v1402, -inf
    %1899 = vmax.xlane.f32.xlu0 %v1898
    %v1900 = vpop.xlane.xlu0 %1899
    %v1901 = vsel %vm1861, %v1426, -inf
    %1902 = vmax.xlane.f32.xlu0 %v1901
    %v1903 = vpop.xlane.xlu0 %1902
    %v1904 = vsel %vm1861, %v1450, -inf
    %1905 = vmax.xlane.f32.xlu0 %v1904
    %v1906 = vpop.xlane.xlu0 %1905
    %v1907 = vsel %vm1861, %v1474, -inf
    %1908 = vmax.xlane.f32.xlu0 %v1907
    %v1909 = vpop.xlane.xlu0 %1908
    %v1910 = vsel %vm1861, %v1498, -inf
    %1911 = vmax.xlane.f32.xlu0 %v1910
    %v1912 = vpop.xlane.xlu0 %1911
    %v1913 = vsel %vm1861, %v1522, -inf
    %1914 = vmax.xlane.f32.xlu0 %v1913
    %v1915 = vpop.xlane.xlu0 %1914
    %v1916 = vsel %vm1861, %v1546, -inf
    %1917 = vmax.xlane.f32.xlu0 %v1916
    %v1918 = vpop.xlane.xlu0 %1917
    %v1919 = vsel %vm1861, %v1570, -inf
    %1920 = vmax.xlane.f32.xlu0 %v1919
    %v1921 = vpop.xlane.xlu0 %1920
    %v1922 = vsel %vm1861, %v1594, -inf
    %1923 = vmax.xlane.f32.xlu0 %v1922
    %v1924 = vpop.xlane.xlu0 %1923
    %v1925 = vsel %vm1861, %v1618, -inf
    %1926 = vmax.xlane.f32.xlu0 %v1925
    %v1927 = vpop.xlane.xlu0 %1926
    %v1928 = vsel %vm1861, %v1642, -inf
    %1929 = vmax.xlane.f32.xlu0 %v1928
    %v1930 = vpop.xlane.xlu0 %1929
    %v1931 = vsel %vm1861, %v1666, -inf
    %1932 = vmax.xlane.f32.xlu0 %v1931
    %v1933 = vpop.xlane.xlu0 %1932
    %v1934 = vsel %vm1861, %v1690, -inf
    %1935 = vmax.xlane.f32.xlu0 %v1934
    %v1936 = vpop.xlane.xlu0 %1935
    %v1937 = vsel %vm1861, %v1714, -inf
    %1938 = vmax.xlane.f32.xlu0 %v1937
    %v1939 = vpop.xlane.xlu0 %1938
    %v1940 = vsel %vm1861, %v1738, -inf
    %1941 = vmax.xlane.f32.xlu0 %v1940
    %v1942 = vpop.xlane.xlu0 %1941
    %v1943 = vsel %vm1861, %v1762, -inf
    %1944 = vmax.xlane.f32.xlu0 %v1943
    %v1945 = vpop.xlane.xlu0 %1944
    %v1946 = vsel %vm1861, %v1786, -inf
    %1947 = vmax.xlane.f32.xlu0 %v1946
    %v1948 = vpop.xlane.xlu0 %1947
    %v1949 = vsel %vm1861, %v1810, -inf
    %1950 = vmax.xlane.f32.xlu0 %v1949
    %v1951 = vpop.xlane.xlu0 %1950
    %v1952 = vsel %vm1861, %v1834, -inf
    %1953 = vmax.xlane.f32.xlu0 %v1952
    %v1954 = vpop.xlane.xlu0 %1953
    %v1955 = vsel %vm1861, %v1858, -inf
    %1956 = vmax.xlane.f32.xlu0 %v1955
    %v1957 = vpop.xlane.xlu0 %1956
    %v1958 = vsub.f32 %v1114, %v1864
    %v1959 = vsub.f32 %v1138, %v1867
    %v1960 = vsub.f32 %v1162, %v1870
    %v1961 = vsub.f32 %v1186, %v1873
    %v1962 = vsub.f32 %v1210, %v1876
    %v1963 = vsub.f32 %v1234, %v1879
    %v1964 = vsub.f32 %v1258, %v1882
    %v1965 = vsub.f32 %v1282, %v1885
    %v1966 = vsub.f32 %v1306, %v1888
    %v1967 = vsub.f32 %v1330, %v1891
    %v1968 = vsub.f32 %v1354, %v1894
    %v1969 = vsub.f32 %v1378, %v1897
    %v1970 = vsub.f32 %v1402, %v1900
    %v1971 = vsub.f32 %v1426, %v1903
    %v1972 = vsub.f32 %v1450, %v1906
    %v1973 = vsub.f32 %v1474, %v1909
    %v1974 = vsub.f32 %v1498, %v1912
    %v1975 = vsub.f32 %v1522, %v1915
    %v1976 = vsub.f32 %v1546, %v1918
    %v1977 = vsub.f32 %v1570, %v1921
    %v1978 = vsub.f32 %v1594, %v1924
    %v1979 = vsub.f32 %v1618, %v1927
    %v1980 = vsub.f32 %v1642, %v1930
    %v1981 = vsub.f32 %v1666, %v1933
    %v1982 = vsub.f32 %v1690, %v1936
    %v1983 = vsub.f32 %v1714, %v1939
    %v1984 = vsub.f32 %v1738, %v1942
    %v1985 = vsub.f32 %v1762, %v1945
    %v1986 = vsub.f32 %v1786, %v1948
    %v1987 = vsub.f32 %v1810, %v1951
    %v1988 = vsub.f32 %v1834, %v1954
    %v1989 = vsub.f32 %v1858, %v1957
    %v1990 = vmul.f32 %v1958, 1.442695
    %v1991 = vpow.pop %v1990
    %v1992 = vmul.f32 %v1959, 1.442695
    %v1993 = vpow.pop %v1992
    %v1994 = vmul.f32 %v1960, 1.442695
    %v1995 = vpow.pop %v1994
    %v1996 = vmul.f32 %v1961, 1.442695
    %v1997 = vpow.pop %v1996
    %v1998 = vmul.f32 %v1962, 1.442695
    %v1999 = vpow.pop %v1998
    %v2000 = vmul.f32 %v1963, 1.442695
    %v2001 = vpow.pop %v2000
    %v2002 = vmul.f32 %v1964, 1.442695
    %v2003 = vpow.pop %v2002
    %v2004 = vmul.f32 %v1965, 1.442695
    %v2005 = vpow.pop %v2004
    %v2006 = vmul.f32 %v1966, 1.442695
    %v2007 = vpow.pop %v2006
    %v2008 = vmul.f32 %v1967, 1.442695
    %v2009 = vpow.pop %v2008
    %v2010 = vmul.f32 %v1968, 1.442695
    %v2011 = vpow.pop %v2010
    %v2012 = vmul.f32 %v1969, 1.442695
    %v2013 = vpow.pop %v2012
    %v2014 = vmul.f32 %v1970, 1.442695
    %v2015 = vpow.pop %v2014
    %v2016 = vmul.f32 %v1971, 1.442695
    %v2017 = vpow.pop %v2016
    %v2018 = vmul.f32 %v1972, 1.442695
    %v2019 = vpow.pop %v2018
    %v2020 = vmul.f32 %v1973, 1.442695
    %v2021 = vpow.pop %v2020
    %v2022 = vmul.f32 %v1974, 1.442695
    %v2023 = vpow.pop %v2022
    %v2024 = vmul.f32 %v1975, 1.442695
    %v2025 = vpow.pop %v2024
    %v2026 = vmul.f32 %v1976, 1.442695
    %v2027 = vpow.pop %v2026
    %v2028 = vmul.f32 %v1977, 1.442695
    %v2029 = vpow.pop %v2028
    %v2030 = vmul.f32 %v1978, 1.442695
    %v2031 = vpow.pop %v2030
    %v2032 = vmul.f32 %v1979, 1.442695
    %v2033 = vpow.pop %v2032
    %v2034 = vmul.f32 %v1980, 1.442695
    %v2035 = vpow.pop %v2034
    %v2036 = vmul.f32 %v1981, 1.442695
    %v2037 = vpow.pop %v2036
    %v2038 = vmul.f32 %v1982, 1.442695
    %v2039 = vpow.pop %v2038
    %v2040 = vmul.f32 %v1983, 1.442695
    %v2041 = vpow.pop %v2040
    %v2042 = vmul.f32 %v1984, 1.442695
    %v2043 = vpow.pop %v2042
    %v2044 = vmul.f32 %v1985, 1.442695
    %v2045 = vpow.pop %v2044
    %v2046 = vmul.f32 %v1986, 1.442695
    %v2047 = vpow.pop %v2046
    %v2048 = vmul.f32 %v1987, 1.442695
    %v2049 = vpow.pop %v2048
    %v2050 = vmul.f32 %v1988, 1.442695
    %v2051 = vpow.pop %v2050
    %v2052 = vmul.f32 %v1989, 1.442695
    %v2053 = vpow.pop %v2052
    %v2054 = vsel %vm1861, %v1991, 0.0
    %2055 = vadd.xlane.f32.xlu0 %v2054
    %v2056 = vpop.xlane.xlu0 %2055
    %v2057 = vsel %vm1861, %v1993, 0.0
    %2058 = vadd.xlane.f32.xlu0 %v2057
    %v2059 = vpop.xlane.xlu0 %2058
    %v2060 = vsel %vm1861, %v1995, 0.0
    %2061 = vadd.xlane.f32.xlu0 %v2060
    %v2062 = vpop.xlane.xlu0 %2061
    %v2063 = vsel %vm1861, %v1997, 0.0
    %2064 = vadd.xlane.f32.xlu0 %v2063
    %v2065 = vpop.xlane.xlu0 %2064
    %v2066 = vsel %vm1861, %v1999, 0.0
    %2067 = vadd.xlane.f32.xlu0 %v2066
    %v2068 = vpop.xlane.xlu0 %2067
    %v2069 = vsel %vm1861, %v2001, 0.0
    %2070 = vadd.xlane.f32.xlu0 %v2069
    %v2071 = vpop.xlane.xlu0 %2070
    %v2072 = vsel %vm1861, %v2003, 0.0
    %2073 = vadd.xlane.f32.xlu0 %v2072
    %v2074 = vpop.xlane.xlu0 %2073
    %v2075 = vsel %vm1861, %v2005, 0.0
    %2076 = vadd.xlane.f32.xlu0 %v2075
    %v2077 = vpop.xlane.xlu0 %2076
    %v2078 = vsel %vm1861, %v2007, 0.0
    %2079 = vadd.xlane.f32.xlu0 %v2078
    %v2080 = vpop.xlane.xlu0 %2079
    %v2081 = vsel %vm1861, %v2009, 0.0
    %2082 = vadd.xlane.f32.xlu0 %v2081
    %v2083 = vpop.xlane.xlu0 %2082
    %v2084 = vsel %vm1861, %v2011, 0.0
    %2085 = vadd.xlane.f32.xlu0 %v2084
    %v2086 = vpop.xlane.xlu0 %2085
    %v2087 = vsel %vm1861, %v2013, 0.0
    %2088 = vadd.xlane.f32.xlu0 %v2087
    %v2089 = vpop.xlane.xlu0 %2088
    %v2090 = vsel %vm1861, %v2015, 0.0
    %2091 = vadd.xlane.f32.xlu0 %v2090
    %v2092 = vpop.xlane.xlu0 %2091
    %v2093 = vsel %vm1861, %v2017, 0.0
    %2094 = vadd.xlane.f32.xlu0 %v2093
    %v2095 = vpop.xlane.xlu0 %2094
    %v2096 = vsel %vm1861, %v2019, 0.0
    %2097 = vadd.xlane.f32.xlu0 %v2096
    %v2098 = vpop.xlane.xlu0 %2097
    %v2099 = vsel %vm1861, %v2021, 0.0
    %2100 = vadd.xlane.f32.xlu0 %v2099
    %v2101 = vpop.xlane.xlu0 %2100
    %v2102 = vsel %vm1861, %v2023, 0.0
    %2103 = vadd.xlane.f32.xlu0 %v2102
    %v2104 = vpop.xlane.xlu0 %2103
    %v2105 = vsel %vm1861, %v2025, 0.0
    %2106 = vadd.xlane.f32.xlu0 %v2105
    %v2107 = vpop.xlane.xlu0 %2106
    %v2108 = vsel %vm1861, %v2027, 0.0
    %2109 = vadd.xlane.f32.xlu0 %v2108
    %v2110 = vpop.xlane.xlu0 %2109
    %v2111 = vsel %vm1861, %v2029, 0.0
    %2112 = vadd.xlane.f32.xlu0 %v2111
    %v2113 = vpop.xlane.xlu0 %2112
    %v2114 = vsel %vm1861, %v2031, 0.0
    %2115 = vadd.xlane.f32.xlu0 %v2114
    %v2116 = vpop.xlane.xlu0 %2115
    %v2117 = vsel %vm1861, %v2033, 0.0
    %2118 = vadd.xlane.f32.xlu0 %v2117
    %v2119 = vpop.xlane.xlu0 %2118
    %v2120 = vsel %vm1861, %v2035, 0.0
    %2121 = vadd.xlane.f32.xlu0 %v2120
    %v2122 = vpop.xlane.xlu0 %2121
    %v2123 = vsel %vm1861, %v2037, 0.0
    %2124 = vadd.xlane.f32.xlu0 %v2123
    %v2125 = vpop.xlane.xlu0 %2124
    %v2126 = vsel %vm1861, %v2039, 0.0
    %2127 = vadd.xlane.f32.xlu0 %v2126
    %v2128 = vpop.xlane.xlu0 %2127
    %v2129 = vsel %vm1861, %v2041, 0.0
    %2130 = vadd.xlane.f32.xlu0 %v2129
    %v2131 = vpop.xlane.xlu0 %2130
    %v2132 = vsel %vm1861, %v2043, 0.0
    %2133 = vadd.xlane.f32.xlu0 %v2132
    %v2134 = vpop.xlane.xlu0 %2133
    %v2135 = vsel %vm1861, %v2045, 0.0
    %2136 = vadd.xlane.f32.xlu0 %v2135
    %v2137 = vpop.xlane.xlu0 %2136
    %v2138 = vsel %vm1861, %v2047, 0.0
    %2139 = vadd.xlane.f32.xlu0 %v2138
    %v2140 = vpop.xlane.xlu0 %2139
    %v2141 = vsel %vm1861, %v2049, 0.0
    %2142 = vadd.xlane.f32.xlu0 %v2141
    %v2143 = vpop.xlane.xlu0 %2142
    %v2144 = vsel %vm1861, %v2051, 0.0
    %2145 = vadd.xlane.f32.xlu0 %v2144
    %v2146 = vpop.xlane.xlu0 %2145
    %v2147 = vsel %vm1861, %v2053, 0.0
    %2148 = vadd.xlane.f32.xlu0 %v2147
    %v2149 = vpop.xlane.xlu0 %2148
    %v2150 = vpack.c.bf16 %v1991, %v1991
    %v2151 = vpack.c.bf16 %v1993, %v1993
    %v2152 = vpack.c.bf16 %v1995, %v1995
    %v2153 = vpack.c.bf16 %v1997, %v1997
    %v2154 = vpack.c.bf16 %v1999, %v1999
    %v2155 = vpack.c.bf16 %v2001, %v2001
    %v2156 = vpack.c.bf16 %v2003, %v2003
    %v2157 = vpack.c.bf16 %v2005, %v2005
    %v2158 = vpack.c.bf16 %v2007, %v2007
    %v2159 = vpack.c.bf16 %v2009, %v2009
    %v2160 = vpack.c.bf16 %v2011, %v2011
    %v2161 = vpack.c.bf16 %v2013, %v2013
    %v2162 = vpack.c.bf16 %v2015, %v2015
    %v2163 = vpack.c.bf16 %v2017, %v2017
    %v2164 = vpack.c.bf16 %v2019, %v2019
    %v2165 = vpack.c.bf16 %v2021, %v2021
    %v2166 = vpack.c.bf16 %v2023, %v2023
    %v2167 = vpack.c.bf16 %v2025, %v2025
    %v2168 = vpack.c.bf16 %v2027, %v2027
    %v2169 = vpack.c.bf16 %v2029, %v2029
    %v2170 = vpack.c.bf16 %v2031, %v2031
    %v2171 = vpack.c.bf16 %v2033, %v2033
    %v2172 = vpack.c.bf16 %v2035, %v2035
    %v2173 = vpack.c.bf16 %v2037, %v2037
    %v2174 = vpack.c.bf16 %v2039, %v2039
    %v2175 = vpack.c.bf16 %v2041, %v2041
    %v2176 = vpack.c.bf16 %v2043, %v2043
    %v2177 = vpack.c.bf16 %v2045, %v2045
    %v2178 = vpack.c.bf16 %v2047, %v2047
    %v2179 = vpack.c.bf16 %v2049, %v2049
    %v2180 = vpack.c.bf16 %v2051, %v2051
    %v2181 = vpack.c.bf16 %v2053, %v2053
    %v2184 = vunpack.c.l.b16 %v1028
    %v2185 = vunpack.c.l.b16 %v1029
    %v2186 = vpack.c.b16 %v2185, %v2184
    %v2189 = vsel %vm1861, %v2150, 0
    %2191 = vmatpush.bf16.msra.mxu0 0
    %2192 = vmatpush.bf16.msra.mxu0 0
    %2193 = vmatpush.bf16.msra.mxu0 0
    %2194 = vmatpush.bf16.msra.mxu0 0
    %2195 = vmatpush.bf16.msra.mxu0 0
    %2196 = vmatpush.bf16.msra.mxu0 0
    %2197 = vmatpush.bf16.msra.mxu0 0
    %2198 = vmatpush.bf16.msra.mxu0 %v2186
    %2199 = vmatmul.bf16.gmra.mxu0 %v2189
    %v2200 = vpop.f32.mrf.mxu0
    %v2201 = vadd.f32 0.0, %v2200
    %v2202 = vpop.f32.mrf.mxu0
    %2203 = vdwg.mxu0
    %v2206 = vunpack.c.l.b16 %v1030
    %v2207 = vunpack.c.l.b16 %v1031
    %v2208 = vpack.c.b16 %v2207, %v2206
    %v2211 = vsel %vm1861, %v2151, 0
    %2213 = vmatpush.bf16.msra.mxu0 0
    %2214 = vmatpush.bf16.msra.mxu0 0
    %2215 = vmatpush.bf16.msra.mxu0 0
    %2216 = vmatpush.bf16.msra.mxu0 0
    %2217 = vmatpush.bf16.msra.mxu0 0
    %2218 = vmatpush.bf16.msra.mxu0 0
    %2219 = vmatpush.bf16.msra.mxu0 0
    %2220 = vmatpush.bf16.msra.mxu0 %v2208
    %2221 = vmatmul.bf16.gmra.mxu0 %v2211
    %v2222 = vpop.f32.mrf.mxu0
    %v2223 = vadd.f32 0.0, %v2222
    %v2224 = vpop.f32.mrf.mxu0
    %2225 = vdwg.mxu0
    %v2228 = vunpack.c.l.b16 %v1032
    %v2229 = vunpack.c.l.b16 %v1033
    %v2230 = vpack.c.b16 %v2229, %v2228
    %v2233 = vsel %vm1861, %v2152, 0
    %2235 = vmatpush.bf16.msra.mxu0 0
    %2236 = vmatpush.bf16.msra.mxu0 0
    %2237 = vmatpush.bf16.msra.mxu0 0
    %2238 = vmatpush.bf16.msra.mxu0 0
    %2239 = vmatpush.bf16.msra.mxu0 0
    %2240 = vmatpush.bf16.msra.mxu0 0
    %2241 = vmatpush.bf16.msra.mxu0 0
    %2242 = vmatpush.bf16.msra.mxu0 %v2230
    %2243 = vmatmul.bf16.gmra.mxu0 %v2233
    %v2244 = vpop.f32.mrf.mxu0
    %v2245 = vadd.f32 0.0, %v2244
    %v2246 = vpop.f32.mrf.mxu0
    %2247 = vdwg.mxu0
    %v2250 = vunpack.c.l.b16 %v1034
    %v2251 = vunpack.c.l.b16 %v1035
    %v2252 = vpack.c.b16 %v2251, %v2250
    %v2255 = vsel %vm1861, %v2153, 0
    %2257 = vmatpush.bf16.msra.mxu0 0
    %2258 = vmatpush.bf16.msra.mxu0 0
    %2259 = vmatpush.bf16.msra.mxu0 0
    %2260 = vmatpush.bf16.msra.mxu0 0
    %2261 = vmatpush.bf16.msra.mxu0 0
    %2262 = vmatpush.bf16.msra.mxu0 0
    %2263 = vmatpush.bf16.msra.mxu0 0
    %2264 = vmatpush.bf16.msra.mxu0 %v2252
    %2265 = vmatmul.bf16.gmra.mxu0 %v2255
    %v2266 = vpop.f32.mrf.mxu0
    %v2267 = vadd.f32 0.0, %v2266
    %v2268 = vpop.f32.mrf.mxu0
    %2269 = vdwg.mxu0
    %v2272 = vunpack.c.l.b16 %v1036
    %v2273 = vunpack.c.l.b16 %v1037
    %v2274 = vpack.c.b16 %v2273, %v2272
    %v2277 = vsel %vm1861, %v2154, 0
    %2279 = vmatpush.bf16.msra.mxu0 0
    %2280 = vmatpush.bf16.msra.mxu0 0
    %2281 = vmatpush.bf16.msra.mxu0 0
    %2282 = vmatpush.bf16.msra.mxu0 0
    %2283 = vmatpush.bf16.msra.mxu0 0
    %2284 = vmatpush.bf16.msra.mxu0 0
    %2285 = vmatpush.bf16.msra.mxu0 0
    %2286 = vmatpush.bf16.msra.mxu0 %v2274
    %2287 = vmatmul.bf16.gmra.mxu0 %v2277
    %v2288 = vpop.f32.mrf.mxu0
    %v2289 = vadd.f32 0.0, %v2288
    %v2290 = vpop.f32.mrf.mxu0
    %2291 = vdwg.mxu0
    %v2294 = vunpack.c.l.b16 %v1038
    %v2295 = vunpack.c.l.b16 %v1039
    %v2296 = vpack.c.b16 %v2295, %v2294
    %v2299 = vsel %vm1861, %v2155, 0
    %2301 = vmatpush.bf16.msra.mxu0 0
    %2302 = vmatpush.bf16.msra.mxu0 0
    %2303 = vmatpush.bf16.msra.mxu0 0
    %2304 = vmatpush.bf16.msra.mxu0 0
    %2305 = vmatpush.bf16.msra.mxu0 0
    %2306 = vmatpush.bf16.msra.mxu0 0
    %2307 = vmatpush.bf16.msra.mxu0 0
    %2308 = vmatpush.bf16.msra.mxu0 %v2296
    %2309 = vmatmul.bf16.gmra.mxu0 %v2299
    %v2310 = vpop.f32.mrf.mxu0
    %v2311 = vadd.f32 0.0, %v2310
    %v2312 = vpop.f32.mrf.mxu0
    %2313 = vdwg.mxu0
    %v2316 = vunpack.c.l.b16 %v1040
    %v2317 = vunpack.c.l.b16 %v1041
    %v2318 = vpack.c.b16 %v2317, %v2316
    %v2321 = vsel %vm1861, %v2156, 0
    %2323 = vmatpush.bf16.msra.mxu0 0
    %2324 = vmatpush.bf16.msra.mxu0 0
    %2325 = vmatpush.bf16.msra.mxu0 0
    %2326 = vmatpush.bf16.msra.mxu0 0
    %2327 = vmatpush.bf16.msra.mxu0 0
    %2328 = vmatpush.bf16.msra.mxu0 0
    %2329 = vmatpush.bf16.msra.mxu0 0
    %2330 = vmatpush.bf16.msra.mxu0 %v2318
    %2331 = vmatmul.bf16.gmra.mxu0 %v2321
    %v2332 = vpop.f32.mrf.mxu0
    %v2333 = vadd.f32 0.0, %v2332
    %v2334 = vpop.f32.mrf.mxu0
    %2335 = vdwg.mxu0
    %v2338 = vunpack.c.l.b16 %v1042
    %v2339 = vunpack.c.l.b16 %v1043
    %v2340 = vpack.c.b16 %v2339, %v2338
    %v2343 = vsel %vm1861, %v2157, 0
    %2345 = vmatpush.bf16.msra.mxu0 0
    %2346 = vmatpush.bf16.msra.mxu0 0
    %2347 = vmatpush.bf16.msra.mxu0 0
    %2348 = vmatpush.bf16.msra.mxu0 0
    %2349 = vmatpush.bf16.msra.mxu0 0
    %2350 = vmatpush.bf16.msra.mxu0 0
    %2351 = vmatpush.bf16.msra.mxu0 0
    %2352 = vmatpush.bf16.msra.mxu0 %v2340
    %2353 = vmatmul.bf16.gmra.mxu0 %v2343
    %v2354 = vpop.f32.mrf.mxu0
    %v2355 = vadd.f32 0.0, %v2354
    %v2356 = vpop.f32.mrf.mxu0
    %2357 = vdwg.mxu0
    %v2360 = vunpack.c.l.b16 %v1044
    %v2361 = vunpack.c.l.b16 %v1045
    %v2362 = vpack.c.b16 %v2361, %v2360
    %v2365 = vsel %vm1861, %v2158, 0
    %2367 = vmatpush.bf16.msra.mxu0 0
    %2368 = vmatpush.bf16.msra.mxu0 0
    %2369 = vmatpush.bf16.msra.mxu0 0
    %2370 = vmatpush.bf16.msra.mxu0 0
    %2371 = vmatpush.bf16.msra.mxu0 0
    %2372 = vmatpush.bf16.msra.mxu0 0
    %2373 = vmatpush.bf16.msra.mxu0 0
    %2374 = vmatpush.bf16.msra.mxu0 %v2362
    %2375 = vmatmul.bf16.gmra.mxu0 %v2365
    %v2376 = vpop.f32.mrf.mxu0
    %v2377 = vadd.f32 0.0, %v2376
    %v2378 = vpop.f32.mrf.mxu0
    %2379 = vdwg.mxu0
    %v2382 = vunpack.c.l.b16 %v1046
    %v2383 = vunpack.c.l.b16 %v1047
    %v2384 = vpack.c.b16 %v2383, %v2382
    %v2387 = vsel %vm1861, %v2159, 0
    %2389 = vmatpush.bf16.msra.mxu0 0
    %2390 = vmatpush.bf16.msra.mxu0 0
    %2391 = vmatpush.bf16.msra.mxu0 0
    %2392 = vmatpush.bf16.msra.mxu0 0
    %2393 = vmatpush.bf16.msra.mxu0 0
    %2394 = vmatpush.bf16.msra.mxu0 0
    %2395 = vmatpush.bf16.msra.mxu0 0
    %2396 = vmatpush.bf16.msra.mxu0 %v2384
    %2397 = vmatmul.bf16.gmra.mxu0 %v2387
    %v2398 = vpop.f32.mrf.mxu0
    %v2399 = vadd.f32 0.0, %v2398
    %v2400 = vpop.f32.mrf.mxu0
    %2401 = vdwg.mxu0
    %v2404 = vunpack.c.l.b16 %v1048
    %v2405 = vunpack.c.l.b16 %v1049
    %v2406 = vpack.c.b16 %v2405, %v2404
    %v2409 = vsel %vm1861, %v2160, 0
    %2411 = vmatpush.bf16.msra.mxu0 0
    %2412 = vmatpush.bf16.msra.mxu0 0
    %2413 = vmatpush.bf16.msra.mxu0 0
    %2414 = vmatpush.bf16.msra.mxu0 0
    %2415 = vmatpush.bf16.msra.mxu0 0
    %2416 = vmatpush.bf16.msra.mxu0 0
    %2417 = vmatpush.bf16.msra.mxu0 0
    %2418 = vmatpush.bf16.msra.mxu0 %v2406
    %2419 = vmatmul.bf16.gmra.mxu0 %v2409
    %v2420 = vpop.f32.mrf.mxu0
    %v2421 = vadd.f32 0.0, %v2420
    %v2422 = vpop.f32.mrf.mxu0
    %2423 = vdwg.mxu0
    %v2426 = vunpack.c.l.b16 %v1050
    %v2427 = vunpack.c.l.b16 %v1051
    %v2428 = vpack.c.b16 %v2427, %v2426
    %v2431 = vsel %vm1861, %v2161, 0
    %2433 = vmatpush.bf16.msra.mxu0 0
    %2434 = vmatpush.bf16.msra.mxu0 0
    %2435 = vmatpush.bf16.msra.mxu0 0
    %2436 = vmatpush.bf16.msra.mxu0 0
    %2437 = vmatpush.bf16.msra.mxu0 0
    %2438 = vmatpush.bf16.msra.mxu0 0
    %2439 = vmatpush.bf16.msra.mxu0 0
    %2440 = vmatpush.bf16.msra.mxu0 %v2428
    %2441 = vmatmul.bf16.gmra.mxu0 %v2431
    %v2442 = vpop.f32.mrf.mxu0
    %v2443 = vadd.f32 0.0, %v2442
    %v2444 = vpop.f32.mrf.mxu0
    %2445 = vdwg.mxu0
    %v2448 = vunpack.c.l.b16 %v1052
    %v2449 = vunpack.c.l.b16 %v1053
    %v2450 = vpack.c.b16 %v2449, %v2448
    %v2453 = vsel %vm1861, %v2162, 0
    %2455 = vmatpush.bf16.msra.mxu0 0
    %2456 = vmatpush.bf16.msra.mxu0 0
    %2457 = vmatpush.bf16.msra.mxu0 0
    %2458 = vmatpush.bf16.msra.mxu0 0
    %2459 = vmatpush.bf16.msra.mxu0 0
    %2460 = vmatpush.bf16.msra.mxu0 0
    %2461 = vmatpush.bf16.msra.mxu0 0
    %2462 = vmatpush.bf16.msra.mxu0 %v2450
    %2463 = vmatmul.bf16.gmra.mxu0 %v2453
    %v2464 = vpop.f32.mrf.mxu0
    %v2465 = vadd.f32 0.0, %v2464
    %v2466 = vpop.f32.mrf.mxu0
    %2467 = vdwg.mxu0
    %v2470 = vunpack.c.l.b16 %v1054
    %v2471 = vunpack.c.l.b16 %v1055
    %v2472 = vpack.c.b16 %v2471, %v2470
    %v2475 = vsel %vm1861, %v2163, 0
    %2477 = vmatpush.bf16.msra.mxu0 0
    %2478 = vmatpush.bf16.msra.mxu0 0
    %2479 = vmatpush.bf16.msra.mxu0 0
    %2480 = vmatpush.bf16.msra.mxu0 0
    %2481 = vmatpush.bf16.msra.mxu0 0
    %2482 = vmatpush.bf16.msra.mxu0 0
    %2483 = vmatpush.bf16.msra.mxu0 0
    %2484 = vmatpush.bf16.msra.mxu0 %v2472
    %2485 = vmatmul.bf16.gmra.mxu0 %v2475
    %v2486 = vpop.f32.mrf.mxu0
    %v2487 = vadd.f32 0.0, %v2486
    %v2488 = vpop.f32.mrf.mxu0
    %2489 = vdwg.mxu0
    %v2492 = vunpack.c.l.b16 %v1056
    %v2493 = vunpack.c.l.b16 %v1057
    %v2494 = vpack.c.b16 %v2493, %v2492
    %v2497 = vsel %vm1861, %v2164, 0
    %2499 = vmatpush.bf16.msra.mxu0 0
    %2500 = vmatpush.bf16.msra.mxu0 0
    %2501 = vmatpush.bf16.msra.mxu0 0
    %2502 = vmatpush.bf16.msra.mxu0 0
    %2503 = vmatpush.bf16.msra.mxu0 0
    %2504 = vmatpush.bf16.msra.mxu0 0
    %2505 = vmatpush.bf16.msra.mxu0 0
    %2506 = vmatpush.bf16.msra.mxu0 %v2494
    %2507 = vmatmul.bf16.gmra.mxu0 %v2497
    %v2508 = vpop.f32.mrf.mxu0
    %v2509 = vadd.f32 0.0, %v2508
    %v2510 = vpop.f32.mrf.mxu0
    %2511 = vdwg.mxu0
    %v2514 = vunpack.c.l.b16 %v1058
    %v2515 = vunpack.c.l.b16 %v1059
    %v2516 = vpack.c.b16 %v2515, %v2514
    %v2519 = vsel %vm1861, %v2165, 0
    %2521 = vmatpush.bf16.msra.mxu0 0
    %2522 = vmatpush.bf16.msra.mxu0 0
    %2523 = vmatpush.bf16.msra.mxu0 0
    %2524 = vmatpush.bf16.msra.mxu0 0
    %2525 = vmatpush.bf16.msra.mxu0 0
    %2526 = vmatpush.bf16.msra.mxu0 0
    %2527 = vmatpush.bf16.msra.mxu0 0
    %2528 = vmatpush.bf16.msra.mxu0 %v2516
    %2529 = vmatmul.bf16.gmra.mxu0 %v2519
    %v2530 = vpop.f32.mrf.mxu0
    %v2531 = vadd.f32 0.0, %v2530
    %v2532 = vpop.f32.mrf.mxu0
    %2533 = vdwg.mxu0
    %v2536 = vunpack.c.l.b16 %v1060
    %v2537 = vunpack.c.l.b16 %v1061
    %v2538 = vpack.c.b16 %v2537, %v2536
    %v2541 = vsel %vm1861, %v2166, 0
    %2543 = vmatpush.bf16.msra.mxu0 0
    %2544 = vmatpush.bf16.msra.mxu0 0
    %2545 = vmatpush.bf16.msra.mxu0 0
    %2546 = vmatpush.bf16.msra.mxu0 0
    %2547 = vmatpush.bf16.msra.mxu0 0
    %2548 = vmatpush.bf16.msra.mxu0 0
    %2549 = vmatpush.bf16.msra.mxu0 0
    %2550 = vmatpush.bf16.msra.mxu0 %v2538
    %2551 = vmatmul.bf16.gmra.mxu0 %v2541
    %v2552 = vpop.f32.mrf.mxu0
    %v2553 = vadd.f32 0.0, %v2552
    %v2554 = vpop.f32.mrf.mxu0
    %2555 = vdwg.mxu0
    %v2558 = vunpack.c.l.b16 %v1062
    %v2559 = vunpack.c.l.b16 %v1063
    %v2560 = vpack.c.b16 %v2559, %v2558
    %v2563 = vsel %vm1861, %v2167, 0
    %2565 = vmatpush.bf16.msra.mxu0 0
    %2566 = vmatpush.bf16.msra.mxu0 0
    %2567 = vmatpush.bf16.msra.mxu0 0
    %2568 = vmatpush.bf16.msra.mxu0 0
    %2569 = vmatpush.bf16.msra.mxu0 0
    %2570 = vmatpush.bf16.msra.mxu0 0
    %2571 = vmatpush.bf16.msra.mxu0 0
    %2572 = vmatpush.bf16.msra.mxu0 %v2560
    %2573 = vmatmul.bf16.gmra.mxu0 %v2563
    %v2574 = vpop.f32.mrf.mxu0
    %v2575 = vadd.f32 0.0, %v2574
    %v2576 = vpop.f32.mrf.mxu0
    %2577 = vdwg.mxu0
    %v2580 = vunpack.c.l.b16 %v1064
    %v2581 = vunpack.c.l.b16 %v1065
    %v2582 = vpack.c.b16 %v2581, %v2580
    %v2585 = vsel %vm1861, %v2168, 0
    %2587 = vmatpush.bf16.msra.mxu0 0
    %2588 = vmatpush.bf16.msra.mxu0 0
    %2589 = vmatpush.bf16.msra.mxu0 0
    %2590 = vmatpush.bf16.msra.mxu0 0
    %2591 = vmatpush.bf16.msra.mxu0 0
    %2592 = vmatpush.bf16.msra.mxu0 0
    %2593 = vmatpush.bf16.msra.mxu0 0
    %2594 = vmatpush.bf16.msra.mxu0 %v2582
    %2595 = vmatmul.bf16.gmra.mxu0 %v2585
    %v2596 = vpop.f32.mrf.mxu0
    %v2597 = vadd.f32 0.0, %v2596
    %v2598 = vpop.f32.mrf.mxu0
    %2599 = vdwg.mxu0
    %v2602 = vunpack.c.l.b16 %v1066
    %v2603 = vunpack.c.l.b16 %v1067
    %v2604 = vpack.c.b16 %v2603, %v2602
    %v2607 = vsel %vm1861, %v2169, 0
    %2609 = vmatpush.bf16.msra.mxu0 0
    %2610 = vmatpush.bf16.msra.mxu0 0
    %2611 = vmatpush.bf16.msra.mxu0 0
    %2612 = vmatpush.bf16.msra.mxu0 0
    %2613 = vmatpush.bf16.msra.mxu0 0
    %2614 = vmatpush.bf16.msra.mxu0 0
    %2615 = vmatpush.bf16.msra.mxu0 0
    %2616 = vmatpush.bf16.msra.mxu0 %v2604
    %2617 = vmatmul.bf16.gmra.mxu0 %v2607
    %v2618 = vpop.f32.mrf.mxu0
    %v2619 = vadd.f32 0.0, %v2618
    %v2620 = vpop.f32.mrf.mxu0
    %2621 = vdwg.mxu0
    %v2624 = vunpack.c.l.b16 %v1068
    %v2625 = vunpack.c.l.b16 %v1069
    %v2626 = vpack.c.b16 %v2625, %v2624
    %v2629 = vsel %vm1861, %v2170, 0
    %2631 = vmatpush.bf16.msra.mxu0 0
    %2632 = vmatpush.bf16.msra.mxu0 0
    %2633 = vmatpush.bf16.msra.mxu0 0
    %2634 = vmatpush.bf16.msra.mxu0 0
    %2635 = vmatpush.bf16.msra.mxu0 0
    %2636 = vmatpush.bf16.msra.mxu0 0
    %2637 = vmatpush.bf16.msra.mxu0 0
    %2638 = vmatpush.bf16.msra.mxu0 %v2626
    %2639 = vmatmul.bf16.gmra.mxu0 %v2629
    %v2640 = vpop.f32.mrf.mxu0
    %v2641 = vadd.f32 0.0, %v2640
    %v2642 = vpop.f32.mrf.mxu0
    %2643 = vdwg.mxu0
    %v2646 = vunpack.c.l.b16 %v1070
    %v2647 = vunpack.c.l.b16 %v1071
    %v2648 = vpack.c.b16 %v2647, %v2646
    %v2651 = vsel %vm1861, %v2171, 0
    %2653 = vmatpush.bf16.msra.mxu0 0
    %2654 = vmatpush.bf16.msra.mxu0 0
    %2655 = vmatpush.bf16.msra.mxu0 0
    %2656 = vmatpush.bf16.msra.mxu0 0
    %2657 = vmatpush.bf16.msra.mxu0 0
    %2658 = vmatpush.bf16.msra.mxu0 0
    %2659 = vmatpush.bf16.msra.mxu0 0
    %2660 = vmatpush.bf16.msra.mxu0 %v2648
    %2661 = vmatmul.bf16.gmra.mxu0 %v2651
    %v2662 = vpop.f32.mrf.mxu0
    %v2663 = vadd.f32 0.0, %v2662
    %v2664 = vpop.f32.mrf.mxu0
    %2665 = vdwg.mxu0
    %v2668 = vunpack.c.l.b16 %v1072
    %v2669 = vunpack.c.l.b16 %v1073
    %v2670 = vpack.c.b16 %v2669, %v2668
    %v2673 = vsel %vm1861, %v2172, 0
    %2675 = vmatpush.bf16.msra.mxu0 0
    %2676 = vmatpush.bf16.msra.mxu0 0
    %2677 = vmatpush.bf16.msra.mxu0 0
    %2678 = vmatpush.bf16.msra.mxu0 0
    %2679 = vmatpush.bf16.msra.mxu0 0
    %2680 = vmatpush.bf16.msra.mxu0 0
    %2681 = vmatpush.bf16.msra.mxu0 0
    %2682 = vmatpush.bf16.msra.mxu0 %v2670
    %2683 = vmatmul.bf16.gmra.mxu0 %v2673
    %v2684 = vpop.f32.mrf.mxu0
    %v2685 = vadd.f32 0.0, %v2684
    %v2686 = vpop.f32.mrf.mxu0
    %2687 = vdwg.mxu0
    %v2690 = vunpack.c.l.b16 %v1074
    %v2691 = vunpack.c.l.b16 %v1075
    %v2692 = vpack.c.b16 %v2691, %v2690
    %v2695 = vsel %vm1861, %v2173, 0
    %2697 = vmatpush.bf16.msra.mxu0 0
    %2698 = vmatpush.bf16.msra.mxu0 0
    %2699 = vmatpush.bf16.msra.mxu0 0
    %2700 = vmatpush.bf16.msra.mxu0 0
    %2701 = vmatpush.bf16.msra.mxu0 0
    %2702 = vmatpush.bf16.msra.mxu0 0
    %2703 = vmatpush.bf16.msra.mxu0 0
    %2704 = vmatpush.bf16.msra.mxu0 %v2692
    %2705 = vmatmul.bf16.gmra.mxu0 %v2695
    %v2706 = vpop.f32.mrf.mxu0
    %v2707 = vadd.f32 0.0, %v2706
    %v2708 = vpop.f32.mrf.mxu0
    %2709 = vdwg.mxu0
    %v2712 = vunpack.c.l.b16 %v1076
    %v2713 = vunpack.c.l.b16 %v1077
    %v2714 = vpack.c.b16 %v2713, %v2712
    %v2717 = vsel %vm1861, %v2174, 0
    %2719 = vmatpush.bf16.msra.mxu0 0
    %2720 = vmatpush.bf16.msra.mxu0 0
    %2721 = vmatpush.bf16.msra.mxu0 0
    %2722 = vmatpush.bf16.msra.mxu0 0
    %2723 = vmatpush.bf16.msra.mxu0 0
    %2724 = vmatpush.bf16.msra.mxu0 0
    %2725 = vmatpush.bf16.msra.mxu0 0
    %2726 = vmatpush.bf16.msra.mxu0 %v2714
    %2727 = vmatmul.bf16.gmra.mxu0 %v2717
    %v2728 = vpop.f32.mrf.mxu0
    %v2729 = vadd.f32 0.0, %v2728
    %v2730 = vpop.f32.mrf.mxu0
    %2731 = vdwg.mxu0
    %v2734 = vunpack.c.l.b16 %v1078
    %v2735 = vunpack.c.l.b16 %v1079
    %v2736 = vpack.c.b16 %v2735, %v2734
    %v2739 = vsel %vm1861, %v2175, 0
    %2741 = vmatpush.bf16.msra.mxu0 0
    %2742 = vmatpush.bf16.msra.mxu0 0
    %2743 = vmatpush.bf16.msra.mxu0 0
    %2744 = vmatpush.bf16.msra.mxu0 0
    %2745 = vmatpush.bf16.msra.mxu0 0
    %2746 = vmatpush.bf16.msra.mxu0 0
    %2747 = vmatpush.bf16.msra.mxu0 0
    %2748 = vmatpush.bf16.msra.mxu0 %v2736
    %2749 = vmatmul.bf16.gmra.mxu0 %v2739
    %v2750 = vpop.f32.mrf.mxu0
    %v2751 = vadd.f32 0.0, %v2750
    %v2752 = vpop.f32.mrf.mxu0
    %2753 = vdwg.mxu0
    %v2756 = vunpack.c.l.b16 %v1080
    %v2757 = vunpack.c.l.b16 %v1081
    %v2758 = vpack.c.b16 %v2757, %v2756
    %v2761 = vsel %vm1861, %v2176, 0
    %2763 = vmatpush.bf16.msra.mxu0 0
    %2764 = vmatpush.bf16.msra.mxu0 0
    %2765 = vmatpush.bf16.msra.mxu0 0
    %2766 = vmatpush.bf16.msra.mxu0 0
    %2767 = vmatpush.bf16.msra.mxu0 0
    %2768 = vmatpush.bf16.msra.mxu0 0
    %2769 = vmatpush.bf16.msra.mxu0 0
    %2770 = vmatpush.bf16.msra.mxu0 %v2758
    %2771 = vmatmul.bf16.gmra.mxu0 %v2761
    %v2772 = vpop.f32.mrf.mxu0
    %v2773 = vadd.f32 0.0, %v2772
    %v2774 = vpop.f32.mrf.mxu0
    %2775 = vdwg.mxu0
    %v2778 = vunpack.c.l.b16 %v1082
    %v2779 = vunpack.c.l.b16 %v1083
    %v2780 = vpack.c.b16 %v2779, %v2778
    %v2783 = vsel %vm1861, %v2177, 0
    %2785 = vmatpush.bf16.msra.mxu0 0
    %2786 = vmatpush.bf16.msra.mxu0 0
    %2787 = vmatpush.bf16.msra.mxu0 0
    %2788 = vmatpush.bf16.msra.mxu0 0
    %2789 = vmatpush.bf16.msra.mxu0 0
    %2790 = vmatpush.bf16.msra.mxu0 0
    %2791 = vmatpush.bf16.msra.mxu0 0
    %2792 = vmatpush.bf16.msra.mxu0 %v2780
    %2793 = vmatmul.bf16.gmra.mxu0 %v2783
    %v2794 = vpop.f32.mrf.mxu0
    %v2795 = vadd.f32 0.0, %v2794
    %v2796 = vpop.f32.mrf.mxu0
    %2797 = vdwg.mxu0
    %v2800 = vunpack.c.l.b16 %v1084
    %v2801 = vunpack.c.l.b16 %v1085
    %v2802 = vpack.c.b16 %v2801, %v2800
    %v2805 = vsel %vm1861, %v2178, 0
    %2807 = vmatpush.bf16.msra.mxu0 0
    %2808 = vmatpush.bf16.msra.mxu0 0
    %2809 = vmatpush.bf16.msra.mxu0 0
    %2810 = vmatpush.bf16.msra.mxu0 0
    %2811 = vmatpush.bf16.msra.mxu0 0
    %2812 = vmatpush.bf16.msra.mxu0 0
    %2813 = vmatpush.bf16.msra.mxu0 0
    %2814 = vmatpush.bf16.msra.mxu0 %v2802
    %2815 = vmatmul.bf16.gmra.mxu0 %v2805
    %v2816 = vpop.f32.mrf.mxu0
    %v2817 = vadd.f32 0.0, %v2816
    %v2818 = vpop.f32.mrf.mxu0
    %2819 = vdwg.mxu0
    %v2822 = vunpack.c.l.b16 %v1086
    %v2823 = vunpack.c.l.b16 %v1087
    %v2824 = vpack.c.b16 %v2823, %v2822
    %v2827 = vsel %vm1861, %v2179, 0
    %2829 = vmatpush.bf16.msra.mxu0 0
    %2830 = vmatpush.bf16.msra.mxu0 0
    %2831 = vmatpush.bf16.msra.mxu0 0
    %2832 = vmatpush.bf16.msra.mxu0 0
    %2833 = vmatpush.bf16.msra.mxu0 0
    %2834 = vmatpush.bf16.msra.mxu0 0
    %2835 = vmatpush.bf16.msra.mxu0 0
    %2836 = vmatpush.bf16.msra.mxu0 %v2824
    %2837 = vmatmul.bf16.gmra.mxu0 %v2827
    %v2838 = vpop.f32.mrf.mxu0
    %v2839 = vadd.f32 0.0, %v2838
    %v2840 = vpop.f32.mrf.mxu0
    %2841 = vdwg.mxu0
    %v2844 = vunpack.c.l.b16 %v1088
    %v2845 = vunpack.c.l.b16 %v1089
    %v2846 = vpack.c.b16 %v2845, %v2844
    %v2849 = vsel %vm1861, %v2180, 0
    %2851 = vmatpush.bf16.msra.mxu0 0
    %2852 = vmatpush.bf16.msra.mxu0 0
    %2853 = vmatpush.bf16.msra.mxu0 0
    %2854 = vmatpush.bf16.msra.mxu0 0
    %2855 = vmatpush.bf16.msra.mxu0 0
    %2856 = vmatpush.bf16.msra.mxu0 0
    %2857 = vmatpush.bf16.msra.mxu0 0
    %2858 = vmatpush.bf16.msra.mxu0 %v2846
    %2859 = vmatmul.bf16.gmra.mxu0 %v2849
    %v2860 = vpop.f32.mrf.mxu0
    %v2861 = vadd.f32 0.0, %v2860
    %v2862 = vpop.f32.mrf.mxu0
    %2863 = vdwg.mxu0
    %v2866 = vunpack.c.l.b16 %v1090
    %v2867 = vunpack.c.l.b16 %v1091
    %v2868 = vpack.c.b16 %v2867, %v2866
    %v2871 = vsel %vm1861, %v2181, 0
    %2873 = vmatpush.bf16.msra.mxu0 0
    %2874 = vmatpush.bf16.msra.mxu0 0
    %2875 = vmatpush.bf16.msra.mxu0 0
    %2876 = vmatpush.bf16.msra.mxu0 0
    %2877 = vmatpush.bf16.msra.mxu0 0
    %2878 = vmatpush.bf16.msra.mxu0 0
    %2879 = vmatpush.bf16.msra.mxu0 0
    %2880 = vmatpush.bf16.msra.mxu0 %v2868
    %2881 = vmatmul.bf16.gmra.mxu0 %v2871
    %v2882 = vpop.f32.mrf.mxu0
    %v2883 = vadd.f32 0.0, %v2882
    %v2884 = vpop.f32.mrf.mxu0
    %2885 = vdwg.mxu0
    %v2886 = vrcp.pop %v2056
    %v2887 = vrcp.pop %v2059
    %v2888 = vrcp.pop %v2062
    %v2889 = vrcp.pop %v2065
    %v2890 = vrcp.pop %v2068
    %v2891 = vrcp.pop %v2071
    %v2892 = vrcp.pop %v2074
    %v2893 = vrcp.pop %v2077
    %v2894 = vrcp.pop %v2080
    %v2895 = vrcp.pop %v2083
    %v2896 = vrcp.pop %v2086
    %v2897 = vrcp.pop %v2089
    %v2898 = vrcp.pop %v2092
    %v2899 = vrcp.pop %v2095
    %v2900 = vrcp.pop %v2098
    %v2901 = vrcp.pop %v2101
    %v2902 = vrcp.pop %v2104
    %v2903 = vrcp.pop %v2107
    %v2904 = vrcp.pop %v2110
    %v2905 = vrcp.pop %v2113
    %v2906 = vrcp.pop %v2116
    %v2907 = vrcp.pop %v2119
    %v2908 = vrcp.pop %v2122
    %v2909 = vrcp.pop %v2125
    %v2910 = vrcp.pop %v2128
    %v2911 = vrcp.pop %v2131
    %v2912 = vrcp.pop %v2134
    %v2913 = vrcp.pop %v2137
    %v2914 = vrcp.pop %v2140
    %v2915 = vrcp.pop %v2143
    %v2916 = vrcp.pop %v2146
    %v2917 = vrcp.pop %v2149
    %v2918 = vmul.f32 %v2201, %v2886
    %v2919 = vmul.f32 %v2223, %v2887
    %v2920 = vmul.f32 %v2245, %v2888
    %v2921 = vmul.f32 %v2267, %v2889
    %v2922 = vmul.f32 %v2289, %v2890
    %v2923 = vmul.f32 %v2311, %v2891
    %v2924 = vmul.f32 %v2333, %v2892
    %v2925 = vmul.f32 %v2355, %v2893
    %v2926 = vmul.f32 %v2377, %v2894
    %v2927 = vmul.f32 %v2399, %v2895
    %v2928 = vmul.f32 %v2421, %v2896
    %v2929 = vmul.f32 %v2443, %v2897
    %v2930 = vmul.f32 %v2465, %v2898
    %v2931 = vmul.f32 %v2487, %v2899
    %v2932 = vmul.f32 %v2509, %v2900
    %v2933 = vmul.f32 %v2531, %v2901
    %v2934 = vmul.f32 %v2553, %v2902
    %v2935 = vmul.f32 %v2575, %v2903
    %v2936 = vmul.f32 %v2597, %v2904
    %v2937 = vmul.f32 %v2619, %v2905
    %v2938 = vmul.f32 %v2641, %v2906
    %v2939 = vmul.f32 %v2663, %v2907
    %v2940 = vmul.f32 %v2685, %v2908
    %v2941 = vmul.f32 %v2707, %v2909
    %v2942 = vmul.f32 %v2729, %v2910
    %v2943 = vmul.f32 %v2751, %v2911
    %v2944 = vmul.f32 %v2773, %v2912
    %v2945 = vmul.f32 %v2795, %v2913
    %v2946 = vmul.f32 %v2817, %v2914
    %v2947 = vmul.f32 %v2839, %v2915
    %v2948 = vmul.f32 %v2861, %v2916
    %v2949 = vmul.f32 %v2883, %v2917
    %v2950 = vpack.c.bf16 %v2918, %v2918
    %v2951 = vpack.c.bf16 %v2919, %v2919
    %v2952 = vpack.c.bf16 %v2920, %v2920
    %v2953 = vpack.c.bf16 %v2921, %v2921
    %v2954 = vpack.c.bf16 %v2922, %v2922
    %v2955 = vpack.c.bf16 %v2923, %v2923
    %v2956 = vpack.c.bf16 %v2924, %v2924
    %v2957 = vpack.c.bf16 %v2925, %v2925
    %v2958 = vpack.c.bf16 %v2926, %v2926
    %v2959 = vpack.c.bf16 %v2927, %v2927
    %v2960 = vpack.c.bf16 %v2928, %v2928
    %v2961 = vpack.c.bf16 %v2929, %v2929
    %v2962 = vpack.c.bf16 %v2930, %v2930
    %v2963 = vpack.c.bf16 %v2931, %v2931
    %v2964 = vpack.c.bf16 %v2932, %v2932
    %v2965 = vpack.c.bf16 %v2933, %v2933
    %v2966 = vpack.c.bf16 %v2934, %v2934
    %v2967 = vpack.c.bf16 %v2935, %v2935
    %v2968 = vpack.c.bf16 %v2936, %v2936
    %v2969 = vpack.c.bf16 %v2937, %v2937
    %v2970 = vpack.c.bf16 %v2938, %v2938
    %v2971 = vpack.c.bf16 %v2939, %v2939
    %v2972 = vpack.c.bf16 %v2940, %v2940
    %v2973 = vpack.c.bf16 %v2941, %v2941
    %v2974 = vpack.c.bf16 %v2942, %v2942
    %v2975 = vpack.c.bf16 %v2943, %v2943
    %v2976 = vpack.c.bf16 %v2944, %v2944
    %v2977 = vpack.c.bf16 %v2945, %v2945
    %v2978 = vpack.c.bf16 %v2946, %v2946
    %v2979 = vpack.c.bf16 %v2947, %v2947
    %v2980 = vpack.c.bf16 %v2948, %v2948
    %v2981 = vpack.c.bf16 %v2949, %v2949
    %v2982 = vld [vmem:[%s6] sm:$0xf]
    %v2983 = vld [vmem:[%s6 + $0x4] sm:$0xf]
    %v2984 = vld [vmem:[%s6 + $0x8] sm:$0xf]
    %v2985 = vld [vmem:[%s6 + $0xc] sm:$0xf]
    %v2994 = vunpack.c.l.b16 %v2950
    %v2995 = vunpack.c.l.b16 %v2951
    %v2996 = vunpack.c.l.b16 %v2952
    %v2997 = vunpack.c.l.b16 %v2953
    %v2998 = vunpack.c.l.b16 %v2954
    %v2999 = vunpack.c.l.b16 %v2955
    %v3000 = vunpack.c.l.b16 %v2956
    %v3001 = vunpack.c.l.b16 %v2957
    %v3002 = vpack.c.b16 %v2995, %v2994
    %v3003 = vpack.c.b16 %v2997, %v2996
    %v3004 = vpack.c.b16 %v2999, %v2998
    %v3005 = vpack.c.b16 %v3001, %v3000
    %v3007 = vsel %vm1097, %v3002, 0
    %v3010 = vsel %vm1097, %v3003, 0
    %v3013 = vsel %vm1097, %v3004, 0
    %v3016 = vsel %vm1097, %v3005, 0
    %vm3018 = vcmask 1043456
    %v3020 = vsel %vm3018, %v2982, 0
    %3022 = vmatpush.bf16.msra.mxu0 0
    %3023 = vmatpush.bf16.msra.mxu0 0
    %3024 = vmatpush.bf16.msra.mxu0 0
    %3025 = vmatpush.bf16.msra.mxu0 0
    %3026 = vmatpush.bf16.msra.mxu0 0
    %3027 = vmatpush.bf16.msra.mxu0 0
    %3028 = vmatpush.bf16.msra.mxu0 0
    %3029 = vmatpush.bf16.msra.mxu0 %v3020
    %3030 = vmatmul.bf16.gmra.mxu0 %v3007
    %v3031 = vpop.f32.mrf.mxu0
    %v3032 = vadd.f32 0.0, %v3031
    %v3033 = vpop.f32.mrf.mxu0
    %v3034 = vadd.f32 0.0, %v3033
    %3035 = vmatmul.bf16.gmra.mxu0 %v3010
    %v3036 = vpop.f32.mrf.mxu0
    %v3037 = vadd.f32 0.0, %v3036
    %v3038 = vpop.f32.mrf.mxu0
    %v3039 = vadd.f32 0.0, %v3038
    %3040 = vmatmul.bf16.gmra.mxu0 %v3013
    %v3041 = vpop.f32.mrf.mxu0
    %v3042 = vadd.f32 0.0, %v3041
    %v3043 = vpop.f32.mrf.mxu0
    %v3044 = vadd.f32 0.0, %v3043
    %3045 = vmatmul.bf16.gmra.mxu0 %v3016
    %v3046 = vpop.f32.mrf.mxu0
    %v3047 = vadd.f32 0.0, %v3046
    %v3048 = vpop.f32.mrf.mxu0
    %v3049 = vadd.f32 0.0, %v3048
    %3050 = vdwg.mxu0
    %v3059 = vunpack.c.l.b16 %v2958
    %v3060 = vunpack.c.l.b16 %v2959
    %v3061 = vunpack.c.l.b16 %v2960
    %v3062 = vunpack.c.l.b16 %v2961
    %v3063 = vunpack.c.l.b16 %v2962
    %v3064 = vunpack.c.l.b16 %v2963
    %v3065 = vunpack.c.l.b16 %v2964
    %v3066 = vunpack.c.l.b16 %v2965
    %v3067 = vpack.c.b16 %v3060, %v3059
    %v3068 = vpack.c.b16 %v3062, %v3061
    %v3069 = vpack.c.b16 %v3064, %v3063
    %v3070 = vpack.c.b16 %v3066, %v3065
    %v3072 = vsel %vm1097, %v3067, 0
    %v3075 = vsel %vm1097, %v3068, 0
    %v3078 = vsel %vm1097, %v3069, 0
    %v3081 = vsel %vm1097, %v3070, 0
    %v3084 = vsel %vm3018, %v2983, 0
    %3086 = vmatpush.bf16.msra.mxu0 0
    %3087 = vmatpush.bf16.msra.mxu0 0
    %3088 = vmatpush.bf16.msra.mxu0 0
    %3089 = vmatpush.bf16.msra.mxu0 0
    %3090 = vmatpush.bf16.msra.mxu0 0
    %3091 = vmatpush.bf16.msra.mxu0 0
    %3092 = vmatpush.bf16.msra.mxu0 0
    %3093 = vmatpush.bf16.msra.mxu0 %v3084
    %3094 = vmatmul.bf16.gmra.mxu0 %v3072
    %v3095 = vpop.f32.mrf.mxu0
    %v3096 = vadd.f32 0.0, %v3095
    %v3097 = vpop.f32.mrf.mxu0
    %v3098 = vadd.f32 0.0, %v3097
    %3099 = vmatmul.bf16.gmra.mxu0 %v3075
    %v3100 = vpop.f32.mrf.mxu0
    %v3101 = vadd.f32 0.0, %v3100
    %v3102 = vpop.f32.mrf.mxu0
    %v3103 = vadd.f32 0.0, %v3102
    %3104 = vmatmul.bf16.gmra.mxu0 %v3078
    %v3105 = vpop.f32.mrf.mxu0
    %v3106 = vadd.f32 0.0, %v3105
    %v3107 = vpop.f32.mrf.mxu0
    %v3108 = vadd.f32 0.0, %v3107
    %3109 = vmatmul.bf16.gmra.mxu0 %v3081
    %v3110 = vpop.f32.mrf.mxu0
    %v3111 = vadd.f32 0.0, %v3110
    %v3112 = vpop.f32.mrf.mxu0
    %v3113 = vadd.f32 0.0, %v3112
    %3114 = vdwg.mxu0
    %v3123 = vunpack.c.l.b16 %v2966
    %v3124 = vunpack.c.l.b16 %v2967
    %v3125 = vunpack.c.l.b16 %v2968
    %v3126 = vunpack.c.l.b16 %v2969
    %v3127 = vunpack.c.l.b16 %v2970
    %v3128 = vunpack.c.l.b16 %v2971
    %v3129 = vunpack.c.l.b16 %v2972
    %v3130 = vunpack.c.l.b16 %v2973
    %v3131 = vpack.c.b16 %v3124, %v3123
    %v3132 = vpack.c.b16 %v3126, %v3125
    %v3133 = vpack.c.b16 %v3128, %v3127
    %v3134 = vpack.c.b16 %v3130, %v3129
    %v3136 = vsel %vm1097, %v3131, 0
    %v3139 = vsel %vm1097, %v3132, 0
    %v3142 = vsel %vm1097, %v3133, 0
    %v3145 = vsel %vm1097, %v3134, 0
    %v3148 = vsel %vm3018, %v2984, 0
    %3150 = vmatpush.bf16.msra.mxu0 0
    %3151 = vmatpush.bf16.msra.mxu0 0
    %3152 = vmatpush.bf16.msra.mxu0 0
    %3153 = vmatpush.bf16.msra.mxu0 0
    %3154 = vmatpush.bf16.msra.mxu0 0
    %3155 = vmatpush.bf16.msra.mxu0 0
    %3156 = vmatpush.bf16.msra.mxu0 0
    %3157 = vmatpush.bf16.msra.mxu0 %v3148
    %3158 = vmatmul.bf16.gmra.mxu0 %v3136
    %v3159 = vpop.f32.mrf.mxu0
    %v3160 = vadd.f32 0.0, %v3159
    %v3161 = vpop.f32.mrf.mxu0
    %v3162 = vadd.f32 0.0, %v3161
    %3163 = vmatmul.bf16.gmra.mxu0 %v3139
    %v3164 = vpop.f32.mrf.mxu0
    %v3165 = vadd.f32 0.0, %v3164
    %v3166 = vpop.f32.mrf.mxu0
    %v3167 = vadd.f32 0.0, %v3166
    %3168 = vmatmul.bf16.gmra.mxu0 %v3142
    %v3169 = vpop.f32.mrf.mxu0
    %v3170 = vadd.f32 0.0, %v3169
    %v3171 = vpop.f32.mrf.mxu0
    %v3172 = vadd.f32 0.0, %v3171
    %3173 = vmatmul.bf16.gmra.mxu0 %v3145
    %v3174 = vpop.f32.mrf.mxu0
    %v3175 = vadd.f32 0.0, %v3174
    %v3176 = vpop.f32.mrf.mxu0
    %v3177 = vadd.f32 0.0, %v3176
    %3178 = vdwg.mxu0
    %v3187 = vunpack.c.l.b16 %v2974
    %v3188 = vunpack.c.l.b16 %v2975
    %v3189 = vunpack.c.l.b16 %v2976
    %v3190 = vunpack.c.l.b16 %v2977
    %v3191 = vunpack.c.l.b16 %v2978
    %v3192 = vunpack.c.l.b16 %v2979
    %v3193 = vunpack.c.l.b16 %v2980
    %v3194 = vunpack.c.l.b16 %v2981
    %v3195 = vpack.c.b16 %v3188, %v3187
    %v3196 = vpack.c.b16 %v3190, %v3189
    %v3197 = vpack.c.b16 %v3192, %v3191
    %v3198 = vpack.c.b16 %v3194, %v3193
    %v3200 = vsel %vm1097, %v3195, 0
    %v3203 = vsel %vm1097, %v3196, 0
    %v3206 = vsel %vm1097, %v3197, 0
    %v3209 = vsel %vm1097, %v3198, 0
    %v3212 = vsel %vm3018, %v2985, 0
    %3214 = vmatpush.bf16.msra.mxu0 0
    %3215 = vmatpush.bf16.msra.mxu0 0
    %3216 = vmatpush.bf16.msra.mxu0 0
    %3217 = vmatpush.bf16.msra.mxu0 0
    %3218 = vmatpush.bf16.msra.mxu0 0
    %3219 = vmatpush.bf16.msra.mxu0 0
    %3220 = vmatpush.bf16.msra.mxu0 0
    %3221 = vmatpush.bf16.msra.mxu0 %v3212
    %3222 = vmatmul.bf16.gmra.mxu0 %v3200
    %v3223 = vpop.f32.mrf.mxu0
    %v3224 = vadd.f32 0.0, %v3223
    %v3225 = vpop.f32.mrf.mxu0
    %v3226 = vadd.f32 0.0, %v3225
    %3227 = vmatmul.bf16.gmra.mxu0 %v3203
    %v3228 = vpop.f32.mrf.mxu0
    %v3229 = vadd.f32 0.0, %v3228
    %v3230 = vpop.f32.mrf.mxu0
    %v3231 = vadd.f32 0.0, %v3230
    %3232 = vmatmul.bf16.gmra.mxu0 %v3206
    %v3233 = vpop.f32.mrf.mxu0
    %v3234 = vadd.f32 0.0, %v3233
    %v3235 = vpop.f32.mrf.mxu0
    %v3236 = vadd.f32 0.0, %v3235
    %3237 = vmatmul.bf16.gmra.mxu0 %v3209
    %v3238 = vpop.f32.mrf.mxu0
    %v3239 = vadd.f32 0.0, %v3238
    %v3240 = vpop.f32.mrf.mxu0
    %v3241 = vadd.f32 0.0, %v3240
    %3242 = vdwg.mxu0
    %v3243 = vsel %vm119, %v3032, 0.0
    %v3244 = vsel %vm119, %v3096, 0.0
    %v3245 = vadd.f32 %v3243, %v3244
    %v3246 = vsel %vm119, %v3160, 0.0
    %v3247 = vadd.f32 %v3245, %v3246
    %v3248 = vsel %vm119, %v3224, 0.0
    %v3249 = vadd.f32 %v3247, %v3248
    %v3250 = vsel %vm119, %v3034, 0.0
    %v3251 = vsel %vm119, %v3098, 0.0
    %v3252 = vadd.f32 %v3250, %v3251
    %v3253 = vsel %vm119, %v3162, 0.0
    %v3254 = vadd.f32 %v3252, %v3253
    %v3255 = vsel %vm119, %v3226, 0.0
    %v3256 = vadd.f32 %v3254, %v3255
    %v3257 = vsel %vm119, %v3037, 0.0
    %v3258 = vsel %vm119, %v3101, 0.0
    %v3259 = vadd.f32 %v3257, %v3258
    %v3260 = vsel %vm119, %v3165, 0.0
    %v3261 = vadd.f32 %v3259, %v3260
    %v3262 = vsel %vm119, %v3229, 0.0
    %v3263 = vadd.f32 %v3261, %v3262
    %v3264 = vsel %vm119, %v3039, 0.0
    %v3265 = vsel %vm119, %v3103, 0.0
    %v3266 = vadd.f32 %v3264, %v3265
    %v3267 = vsel %vm119, %v3167, 0.0
    %v3268 = vadd.f32 %v3266, %v3267
    %v3269 = vsel %vm119, %v3231, 0.0
    %v3270 = vadd.f32 %v3268, %v3269
    %v3271 = vsel %vm119, %v3042, 0.0
    %v3272 = vsel %vm119, %v3106, 0.0
    %v3273 = vadd.f32 %v3271, %v3272
    %v3274 = vsel %vm119, %v3170, 0.0
    %v3275 = vadd.f32 %v3273, %v3274
    %v3276 = vsel %vm119, %v3234, 0.0
    %v3277 = vadd.f32 %v3275, %v3276
    %v3278 = vsel %vm119, %v3044, 0.0
    %v3279 = vsel %vm119, %v3108, 0.0
    %v3280 = vadd.f32 %v3278, %v3279
    %v3281 = vsel %vm119, %v3172, 0.0
    %v3282 = vadd.f32 %v3280, %v3281
    %v3283 = vsel %vm119, %v3236, 0.0
    %v3284 = vadd.f32 %v3282, %v3283
    %v3285 = vsel %vm119, %v3047, 0.0
    %v3286 = vsel %vm119, %v3111, 0.0
    %v3287 = vadd.f32 %v3285, %v3286
    %v3288 = vsel %vm119, %v3175, 0.0
    %v3289 = vadd.f32 %v3287, %v3288
    %v3290 = vsel %vm119, %v3239, 0.0
    %v3291 = vadd.f32 %v3289, %v3290
    %v3292 = vsel %vm119, %v3049, 0.0
    %v3293 = vsel %vm119, %v3113, 0.0
    %v3294 = vadd.f32 %v3292, %v3293
    %v3295 = vsel %vm119, %v3177, 0.0
    %v3296 = vadd.f32 %v3294, %v3295
    %v3297 = vsel %vm119, %v3241, 0.0
    %v3298 = vadd.f32 %v3296, %v3297
    %v3299 = vld [vmem:[%s7] sm:$0x1]
    %v3301 = vperm.slane %v3299, 0
    %v3303 = vadd.f32 %v3249, %v3301
    %v3304 = vadd.f32 %v3256, %v3301
    %v3305 = vadd.f32 %v3263, %v3301
    %v3306 = vadd.f32 %v3270, %v3301
    %v3307 = vadd.f32 %v3277, %v3301
    %v3308 = vadd.f32 %v3284, %v3301
    %v3309 = vadd.f32 %v3291, %v3301
    %v3310 = vadd.f32 %v3298, %v3301
    %3311 = vst.msk [vmem:[#allocation2] sm:$0xff] %vm119, %v3303
    %3312 = vst.msk [vmem:[#allocation2 + $0x8] sm:$0xff] %vm119, %v3304
    %3313 = vst.msk [vmem:[#allocation2 + $0x10] sm:$0xff] %vm119, %v3305
    %3314 = vst.msk [vmem:[#allocation2 + $0x18] sm:$0xff] %vm119, %v3306
    %3315 = vst.msk [vmem:[#allocation2 + $0x20] sm:$0xff] %vm119, %v3307
    %3316 = vst.msk [vmem:[#allocation2 + $0x28] sm:$0xff] %vm119, %v3308
    %3317 = vst.msk [vmem:[#allocation2 + $0x30] sm:$0xff] %vm119, %v3309
    %3318 = vst.msk [vmem:[#allocation2 + $0x38] sm:$0xff] %vm119, %v3310
    // Predicated region
    $region34: #{tpu_custom_call.1} parent=1 // pred_check
      _
    $region35: #{tpu_custom_call.1} parent=1 // pred_check_branch
      %3320 = sbr.rel (0) target = $region37
    $region36: #{tpu_custom_call.1} parent=1 // pred_region
      %3322 = vsyncadd [#allocation3], 0
      %s3323 = sshll.u32 [#allocation2], 4
      %s3324 = int_to_ptr.vmem [resolvable:$true] %s3323
      %s3325 = sshll.u32 %s8, 4
      %s3326 = int_to_ptr.hbm [resolvable:$true] %s3325
      %3331 = dma.vmem_to_hbm [thread:$0]  %s3324, 1024, %s3326, [#allocation3], 128, 128, 8
    $region37: #{tpu_custom_call.1} parent=1 // pred_fallthru
      _
    // Predicated region
    $region38: #{tpu_custom_call.1} parent=1 // pred_check
      _
    $region39: #{tpu_custom_call.1} parent=1 // pred_check_branch
      %3333 = sbr.rel (0) target = $region41
    $region40: #{tpu_custom_call.1} parent=1 // pred_region
      %3335 = dma.done [#allocation3], 1024
    $region41: #{tpu_custom_call.1} parent=1 // pred_fallthru
      _
    %3336 = vsyncpa [#allocation3], 1

</llo_original>
